<compile_context>
chip_gen: v7x
topology: tpu7x:2x2x1
jax: 0.10.0
libtpu: 0.0.40
codegen_flags: <defaults>
</compile_context>

<pallas_src>
import jax
import jax.numpy as jnp
from jax.experimental import pallas as pl
from jax.experimental.pallas import tpu as pltpu


def decoder_kernel(words_ref,            # SMEM (S, B) int32  - scalar-prefetched token ids
                   ew_hbm,               # HBM  (T, 4H) f32   - embedding @ W_ih^T + b_ih + b_hh
                   wh_ref,               # VMEM (H, 4H) f32   - W_hh^T, resident across the grid
                   hx0_ref, cx0_ref,     # VMEM (B, H)  f32   - initial state
                   keep_ref,             # VMEM (B, 1)  f32   - 1.0 where word == 0 (this step)
                   hc_out_ref,           # VMEM (B, 2H) f32   - final [hx | cx] slab (lane-dense)
                   hx_s, cx_s,           # VMEM scratch (B, H)    - carried state
                   m_s,                  # VMEM scratch (1, 4H)   - activation scale mask
                   gbuf,                 # VMEM scratch (2, B, 4H)- double-buffered gathered rows
                   gsem):                # DMA semaphores (2, B)
    s = pl.program_id(0)
    num_steps = pl.num_programs(0)
    B, H = hx_s.shape

    def start_gather(step, slot):
        # Row gather: one small DMA per batch element, ew[word_id] -> gbuf[slot, b].
        for b in range(B):                                   # B is small & static: unrolled
            wid = words_ref[step, b]
            pltpu.make_async_copy(ew_hbm.at[pl.ds(wid, 1), :],
                                  gbuf.at[slot, pl.ds(b, 1), :],
                                  gsem.at[slot, b]).start()

    def wait_gather(slot):
        for b in range(B):
            pltpu.make_async_copy(ew_hbm.at[pl.ds(0, 1), :],
                                  gbuf.at[slot, pl.ds(b, 1), :],
                                  gsem.at[slot, b]).wait()

    @pl.when(s == 0)
    def _init():
        hx_s[...] = hx0_ref[...]
        cx_s[...] = cx0_ref[...]
        # Hoisted activation mask: 1.0 on the g (tanh) columns, 0.5 elsewhere (sigmoid-via-tanh).
        lane = jax.lax.broadcasted_iota(jnp.int32, (1, 4 * H), 1)
        is_g = (lane >= 2 * H) & (lane < 3 * H)
        m_s[...] = jnp.where(is_g, 1.0, 0.5).astype(jnp.float32)
        start_gather(0, 0)                                   # prime slot 0

    slot = s % 2
    wait_gather(slot)

    @pl.when(s + 1 < num_steps)
    def _prefetch_next():
        start_gather(s + 1, 1 - slot)                        # hide next step's gather

    hx = hx_s[...]
    cx = cx_s[...]

    # Single MXU matmul per step; gathered rows already contain x@W_ih^T + both biases.
    gates = gbuf[slot] + jnp.dot(hx, wh_ref[...], preferred_element_type=jnp.float32)

    # One EUP pass: tanh on g columns, sigmoid (= 0.5*tanh(x/2)+0.5) on i/f/o columns.
    m = m_s[...]                                             # (1, 4H), broadcast over B
    t = jnp.tanh(gates * m)
    act = t * m + (1.0 - m)

    i = act[:, 0 * H:1 * H]
    f = act[:, 1 * H:2 * H]
    g = act[:, 2 * H:3 * H]
    o = act[:, 3 * H:4 * H]

    c_new = f * cx + i * g
    h_new = o * jnp.tanh(c_new)

    # Padding mask: rows whose target word id == 0 keep their previous hidden/cell state.
    keep = keep_ref[...]                                     # (B, 1), exactly 0.0 or 1.0
    hx_s[...] = keep * hx + (1.0 - keep) * h_new
    cx_s[...] = keep * cx + (1.0 - keep) * c_new

    @pl.when(s == num_steps - 1)
    def _finalize():
        hc_out_ref[:, 0:H] = hx_s[...]
        hc_out_ref[:, H:2 * H] = cx_s[...]


def fuse_decoder_params(params):
    """One-time prep outside the decode loop: fold embedding lookup and both biases into one
    per-token gate-row table, transpose the recurrent weight."""
    b = params["b_ih"] + params["b_hh"]
    ew = params["embedding"] @ params["w_ih"].T + b          # (T, 4H): row t = gates from token t
    wh = params["w_hh"].T                                    # (H, 4H)
    return {"ew": jnp.asarray(ew, jnp.float32), "wh": jnp.asarray(wh, jnp.float32)}


def decoder_decode(words_seq, hx, cx, fused):
    """Run S sequential Decoder.forward steps inside ONE pallas_call.

    words_seq: (S, B) int32; hx/cx: (B, H) float32.  Returns the final (hx, cx)."""
    S, B = words_seq.shape
    H = hx.shape[1]
    words_seq = words_seq.astype(jnp.int32)
    keep_mask = (words_seq == 0).astype(jnp.float32)[..., None]      # (S, B, 1)

    grid_spec = pltpu.PrefetchScalarGridSpec(
        num_scalar_prefetch=1,                                       # words -> SMEM
        grid=(S,),
        in_specs=[
            pl.BlockSpec(memory_space=pl.ANY),                       # ew table stays in HBM
            pl.BlockSpec((H, 4 * H), lambda s, w: (0, 0)),           # wh: VMEM-resident
            pl.BlockSpec((B, H), lambda s, w: (0, 0)),               # hx0
            pl.BlockSpec((B, H), lambda s, w: (0, 0)),               # cx0
            pl.BlockSpec((None, B, 1), lambda s, w: (s, 0, 0)),      # per-step keep mask
        ],
        out_specs=pl.BlockSpec((B, 2 * H), lambda s, w: (0, 0)),     # final [hx|cx] slab
        scratch_shapes=[
            pltpu.VMEM((B, H), jnp.float32),                         # hx_s
            pltpu.VMEM((B, H), jnp.float32),                         # cx_s
            pltpu.VMEM((1, 4 * H), jnp.float32),                     # m_s
            pltpu.VMEM((2, B, 4 * H), jnp.float32),                  # gbuf (double buffer)
            pltpu.SemaphoreType.DMA((2, B)),                         # gsem
        ],
    )

    hc = pl.pallas_call(
        decoder_kernel,
        grid_spec=grid_spec,
        out_shape=jax.ShapeDtypeStruct((B, 2 * H), jnp.float32),
        compiler_params=pltpu.CompilerParams(dimension_semantics=("arbitrary",)),
    )(words_seq, fused["ew"], fused["wh"], hx, cx, keep_mask)

    return hc[:, :H], hc[:, H:]


def decoder_forward(target_words, hx, cx, fused):
    """Single-step wrapper with the exact Decoder.forward signature."""
    return decoder_decode(target_words.reshape(1, -1), hx, cx, fused)


def reference_forward(target_words, hx, cx, params):
    """Pure-JAX reference mirroring the PyTorch module (eval mode, one step)."""
    embed = params["embedding"][target_words]
    gates = (embed @ params["w_ih"].T + params["b_ih"]
             + hx @ params["w_hh"].T + params["b_hh"])
    i, f, g, o = jnp.split(gates, 4, axis=1)
    i, f, g, o = jax.nn.sigmoid(i), jax.nn.sigmoid(f), jnp.tanh(g), jax.nn.sigmoid(o)
    c_new = f * cx + i * g
    h_new = o * jnp.tanh(c_new)
    keep = (target_words == 0)[:, None]
    return jnp.where(keep, hx, h_new), jnp.where(keep, cx, c_new)


def init_params(key, target_size, hidden_size):
    k = 1.0 / jnp.sqrt(jnp.float32(hidden_size))
    keys = jax.random.split(key, 5)
    emb = jax.random.normal(keys[0], (target_size, hidden_size), jnp.float32)
    emb = emb.at[0].set(0.0)                                  # padding_idx=0 row zeroed
    w_ih = jax.random.uniform(keys[1], (4 * hidden_size, hidden_size), jnp.float32, -k, k)
    w_hh = jax.random.uniform(keys[2], (4 * hidden_size, hidden_size), jnp.float32, -k, k)
    b_ih = jax.random.uniform(keys[3], (4 * hidden_size,), jnp.float32, -k, k)
    b_hh = jax.random.uniform(keys[4], (4 * hidden_size,), jnp.float32, -k, k)
    # nn.Linear(hidden, target) exists in __init__ but is unused in forward.
    return {"embedding": emb, "w_ih": w_ih, "w_hh": w_hh, "b_ih": b_ih, "b_hh": b_hh}


if __name__ == "__main__":
    B, T, H, S = 8, 64, 64, 6        # batch, vocab, hidden, decode steps
    root = jax.random.PRNGKey(0)
    kp, kw, kh, kc = jax.random.split(root, 4)

    params = init_params(kp, T, H)
    fused = fuse_decoder_params(params)                       # one-time weight fusion

    words_seq = jax.random.randint(kw, (S, B), 0, T, dtype=jnp.int32)
    words_seq = words_seq.at[0, 0].set(0)                     # exercise the padding-mask path
    words_seq = words_seq.at[2, 3].set(0)
    words_seq = words_seq.at[S - 1, 5].set(0)

    hx0 = jax.random.normal(kh, (B, H), jnp.float32)
    cx0 = jax.random.normal(kc, (B, H), jnp.float32)

    # Whole decode loop in one kernel.
    hx_k, cx_k = decoder_decode(words_seq, hx0, cx0, fused)
    jax.block_until_ready((hx_k, cx_k))

    # Reference: S applications of the PyTorch-equivalent single-step forward.
    hx_r, cx_r = hx0, cx0
    for s in range(S):
        hx_r, cx_r = reference_forward(words_seq[s], hx_r, cx_r, params)
    assert jnp.allclose(hx_k, hx_r, atol=1e-5, rtol=1e-5)
    assert jnp.allclose(cx_k, cx_r, atol=1e-5, rtol=1e-5)

    # Single-step wrapper (exact module signature).
    hx1, cx1 = decoder_forward(words_seq[0], hx0, cx0, fused)
    jax.block_until_ready((hx1, cx1))
    hx1_r, cx1_r = reference_forward(words_seq[0], hx0, cx0, params)
    assert jnp.allclose(hx1, hx1_r, atol=1e-5, rtol=1e-5)
    assert jnp.allclose(cx1, cx1_r, atol=1e-5, rtol=1e-5)

    print("KERNEL_OK")
</pallas_src>

<mosaic_0001>
module attributes {stable_mosaic.version = 11 : i64} {
  func.func @decoder_kernel(%arg0: i32, %arg1: memref<6x8xi32, #tpu.memory_space<smem>>, %arg2: memref<64x256xf32, #tpu.memory_space<any>>, %arg3: memref<64x256xf32, #tpu.memory_space<vmem>>, %arg4: memref<8x64xf32, #tpu.memory_space<vmem>>, %arg5: memref<8x64xf32, #tpu.memory_space<vmem>>, %arg6: memref<1x8x1xf32, #tpu.memory_space<vmem>>, %arg7: memref<8x128xf32, #tpu.memory_space<vmem>>, %arg8: memref<8x64xf32, #tpu.memory_space<vmem>>, %arg9: memref<8x64xf32, #tpu.memory_space<vmem>>, %arg10: memref<1x256xf32, #tpu.memory_space<vmem>>, %arg11: memref<2x8x256xf32, #tpu.memory_space<vmem>>, %arg12: memref<2x8x!tpu.dma_semaphore, #tpu.memory_space<semaphore_mem>>) attributes {dimension_semantics = [#tpu.dimension_semantics<arbitrary>], iteration_bounds = array<i64: 6>, scalar_prefetch = 1 : i64, scratch_operands = 5 : i64, tpu.core_type = #tpu.core_type<tc>, window_params = [{}, {pipeline_mode = #tpu.pipeline_mode<synchronous>, transform_indices = @transform_1, window_bounds = array<i64: 64, 256>}, {pipeline_mode = #tpu.pipeline_mode<synchronous>, transform_indices = @transform_2, window_bounds = array<i64: 8, 64>}, {pipeline_mode = #tpu.pipeline_mode<synchronous>, transform_indices = @transform_3, window_bounds = array<i64: 8, 64>}, {transform_indices = @transform_4, window_bounds = array<i64: 1, 8, 1>}, {pipeline_mode = #tpu.pipeline_mode<synchronous>, transform_indices = @transform_5, window_bounds = array<i64: 8, 128>}]} {
    %c0_i32 = arith.constant 0 : i32
    %0 = arith.cmpi eq, %arg0, %c0_i32 : i32
    %1 = arith.extui %0 : i1 to i32
    %c0_i32_0 = arith.constant 0 : i32
    %2 = arith.cmpi ne, %1, %c0_i32_0 : i32
    scf.if %2 {
      %c0_64 = arith.constant 0 : index
      %c0_65 = arith.constant 0 : index
      %105 = vector.load %arg4[%c0_64, %c0_65] : memref<8x64xf32, #tpu.memory_space<vmem>>, vector<8x64xf32>
      %c0_66 = arith.constant 0 : index
      %c0_67 = arith.constant 0 : index
      %106 = vector.load %arg8[%c0_66, %c0_67] : memref<8x64xf32, #tpu.memory_space<vmem>>, vector<8x64xf32>
      tpu.vector_store %arg8[%c0_66, %c0_67], %105 {strides = array<i32>} : memref<8x64xf32, #tpu.memory_space<vmem>>, vector<8x64xf32>,
      %c0_68 = arith.constant 0 : index
      %c0_69 = arith.constant 0 : index
      %107 = vector.load %arg5[%c0_68, %c0_69] : memref<8x64xf32, #tpu.memory_space<vmem>>, vector<8x64xf32>
      %c0_70 = arith.constant 0 : index
      %c0_71 = arith.constant 0 : index
      %108 = vector.load %arg9[%c0_70, %c0_71] : memref<8x64xf32, #tpu.memory_space<vmem>>, vector<8x64xf32>
      tpu.vector_store %arg9[%c0_70, %c0_71], %107 {strides = array<i32>} : memref<8x64xf32, #tpu.memory_space<vmem>>, vector<8x64xf32>,
      %109 = tpu.iota {dimensions = array<i32: 1>} : vector<1x256xi32>
      %c128_i32 = arith.constant 128 : i32
      %110 = vector.broadcast %c128_i32 : i32 to vector<1x256xi32>
      %111 = arith.cmpi sge, %109, %110 : vector<1x256xi32>
      %c192_i32 = arith.constant 192 : i32
      %112 = vector.broadcast %c192_i32 : i32 to vector<1x256xi32>
      %113 = arith.cmpi slt, %109, %112 : vector<1x256xi32>
      %114 = arith.andi %111, %113 : vector<1x256xi1>
      %cst_72 = arith.constant 1.000000e+00 : f32
      %cst_73 = arith.constant 5.000000e-01 : f32
      %115 = vector.broadcast %cst_72 : f32 to vector<1x256xf32>
      %116 = vector.broadcast %cst_73 : f32 to vector<1x256xf32>
      %117 = arith.select %114, %115, %116 : vector<1x256xi1>, vector<1x256xf32>
      %c0_74 = arith.constant 0 : index
      %c0_75 = arith.constant 0 : index
      %118 = vector.load %arg10[%c0_74, %c0_75] : memref<1x256xf32, #tpu.memory_space<vmem>>, vector<1x256xf32>
      tpu.vector_store %arg10[%c0_74, %c0_75], %117 {strides = array<i32>} : memref<1x256xf32, #tpu.memory_space<vmem>>, vector<1x256xf32>,
      %c0_76 = arith.constant 0 : index
      %c0_77 = arith.constant 0 : index
      %119 = memref.load %arg1[%c0_76, %c0_77] : memref<6x8xi32, #tpu.memory_space<smem>>
      %c0_i32_78 = arith.constant 0 : i32
      %c0_i32_79 = arith.constant 0 : i32
      %c0_i32_80 = arith.constant 0 : i32
      %c0_i32_81 = arith.constant 0 : i32
      %120 = tpu.memref_slice %arg2[%119, %c0_i32_81] : memref<64x256xf32, #tpu.memory_space<any>> -> memref<1x256xf32, #tpu.memory_space<any>>
      %c0_i32_82 = arith.constant 0 : i32
      %c0_i32_83 = arith.constant 0 : i32
      %121 = tpu.memref_slice %arg11[%c0_i32_78, %c0_i32_82, %c0_i32_83] : memref<2x8x256xf32, #tpu.memory_space<vmem>> -> memref<1x1x256xf32, #tpu.memory_space<vmem>>
      %122 = tpu.memref_squeeze %121 : memref<1x1x256xf32, #tpu.memory_space<vmem>> -> memref<1x256xf32, #tpu.memory_space<vmem>>
      %123 = tpu.memref_slice %arg12[%c0_i32_79, %c0_i32_80] : memref<2x8x!tpu.dma_semaphore, #tpu.memory_space<semaphore_mem>> -> memref<1x1x!tpu.dma_semaphore, #tpu.memory_space<semaphore_mem>>
      %124 = tpu.memref_squeeze %123 : memref<1x1x!tpu.dma_semaphore, #tpu.memory_space<semaphore_mem>> -> memref<!tpu.dma_semaphore, #tpu.memory_space<semaphore_mem>>
      tpu.enqueue_dma source(%120 : memref<1x256xf32, #tpu.memory_space<any>>) target(%122 : memref<1x256xf32, #tpu.memory_space<vmem>>) target_semaphore(%124 : memref<!tpu.dma_semaphore, #tpu.memory_space<semaphore_mem>>)
      %c0_84 = arith.constant 0 : index
      %c1 = arith.constant 1 : index
      %125 = memref.load %arg1[%c0_84, %c1] : memref<6x8xi32, #tpu.memory_space<smem>>
      %c0_i32_85 = arith.constant 0 : i32
      %c0_i32_86 = arith.constant 0 : i32
      %c1_i32_87 = arith.constant 1 : i32
      %c0_i32_88 = arith.constant 0 : i32
      %126 = tpu.memref_slice %arg2[%125, %c0_i32_88] : memref<64x256xf32, #tpu.memory_space<any>> -> memref<1x256xf32, #tpu.memory_space<any>>
      %c1_i32_89 = arith.constant 1 : i32
      %c0_i32_90 = arith.constant 0 : i32
      %127 = tpu.memref_slice %arg11[%c0_i32_85, %c1_i32_89, %c0_i32_90] : memref<2x8x256xf32, #tpu.memory_space<vmem>> -> memref<1x1x256xf32, #tpu.memory_space<vmem>>
      %128 = tpu.memref_squeeze %127 : memref<1x1x256xf32, #tpu.memory_space<vmem>> -> memref<1x256xf32, #tpu.memory_space<vmem>>
      %129 = tpu.memref_slice %arg12[%c0_i32_86, %c1_i32_87] : memref<2x8x!tpu.dma_semaphore, #tpu.memory_space<semaphore_mem>> -> memref<1x1x!tpu.dma_semaphore, #tpu.memory_space<semaphore_mem>>
      %130 = tpu.memref_squeeze %129 : memref<1x1x!tpu.dma_semaphore, #tpu.memory_space<semaphore_mem>> -> memref<!tpu.dma_semaphore, #tpu.memory_space<semaphore_mem>>
      tpu.enqueue_dma source(%126 : memref<1x256xf32, #tpu.memory_space<any>>) target(%128 : memref<1x256xf32, #tpu.memory_space<vmem>>) target_semaphore(%130 : memref<!tpu.dma_semaphore, #tpu.memory_space<semaphore_mem>>)
      %c0_91 = arith.constant 0 : index
      %c2 = arith.constant 2 : index
      %131 = memref.load %arg1[%c0_91, %c2] : memref<6x8xi32, #tpu.memory_space<smem>>
      %c0_i32_92 = arith.constant 0 : i32
      %c0_i32_93 = arith.constant 0 : i32
      %c2_i32_94 = arith.constant 2 : i32
      %c0_i32_95 = arith.constant 0 : i32
      %132 = tpu.memref_slice %arg2[%131, %c0_i32_95] : memref<64x256xf32, #tpu.memory_space<any>> -> memref<1x256xf32, #tpu.memory_space<any>>
      %c2_i32_96 = arith.constant 2 : i32
      %c0_i32_97 = arith.constant 0 : i32
      %133 = tpu.memref_slice %arg11[%c0_i32_92, %c2_i32_96, %c0_i32_97] : memref<2x8x256xf32, #tpu.memory_space<vmem>> -> memref<1x1x256xf32, #tpu.memory_space<vmem>>
      %134 = tpu.memref_squeeze %133 : memref<1x1x256xf32, #tpu.memory_space<vmem>> -> memref<1x256xf32, #tpu.memory_space<vmem>>
      %135 = tpu.memref_slice %arg12[%c0_i32_93, %c2_i32_94] : memref<2x8x!tpu.dma_semaphore, #tpu.memory_space<semaphore_mem>> -> memref<1x1x!tpu.dma_semaphore, #tpu.memory_space<semaphore_mem>>
      %136 = tpu.memref_squeeze %135 : memref<1x1x!tpu.dma_semaphore, #tpu.memory_space<semaphore_mem>> -> memref<!tpu.dma_semaphore, #tpu.memory_space<semaphore_mem>>
      tpu.enqueue_dma source(%132 : memref<1x256xf32, #tpu.memory_space<any>>) target(%134 : memref<1x256xf32, #tpu.memory_space<vmem>>) target_semaphore(%136 : memref<!tpu.dma_semaphore, #tpu.memory_space<semaphore_mem>>)
      %c0_98 = arith.constant 0 : index
      %c3 = arith.constant 3 : index
      %137 = memref.load %arg1[%c0_98, %c3] : memref<6x8xi32, #tpu.memory_space<smem>>
      %c0_i32_99 = arith.constant 0 : i32
      %c0_i32_100 = arith.constant 0 : i32
      %c3_i32_101 = arith.constant 3 : i32
      %c0_i32_102 = arith.constant 0 : i32
      %138 = tpu.memref_slice %arg2[%137, %c0_i32_102] : memref<64x256xf32, #tpu.memory_space<any>> -> memref<1x256xf32, #tpu.memory_space<any>>
      %c3_i32_103 = arith.constant 3 : i32
      %c0_i32_104 = arith.constant 0 : i32
      %139 = tpu.memref_slice %arg11[%c0_i32_99, %c3_i32_103, %c0_i32_104] : memref<2x8x256xf32, #tpu.memory_space<vmem>> -> memref<1x1x256xf32, #tpu.memory_space<vmem>>
      %140 = tpu.memref_squeeze %139 : memref<1x1x256xf32, #tpu.memory_space<vmem>> -> memref<1x256xf32, #tpu.memory_space<vmem>>
      %141 = tpu.memref_slice %arg12[%c0_i32_100, %c3_i32_101] : memref<2x8x!tpu.dma_semaphore, #tpu.memory_space<semaphore_mem>> -> memref<1x1x!tpu.dma_semaphore, #tpu.memory_space<semaphore_mem>>
      %142 = tpu.memref_squeeze %141 : memref<1x1x!tpu.dma_semaphore, #tpu.memory_space<semaphore_mem>> -> memref<!tpu.dma_semaphore, #tpu.memory_space<semaphore_mem>>
      tpu.enqueue_dma source(%138 : memref<1x256xf32, #tpu.memory_space<any>>) target(%140 : memref<1x256xf32, #tpu.memory_space<vmem>>) target_semaphore(%142 : memref<!tpu.dma_semaphore, #tpu.memory_space<semaphore_mem>>)
      %c0_105 = arith.constant 0 : index
      %c4 = arith.constant 4 : index
      %143 = memref.load %arg1[%c0_105, %c4] : memref<6x8xi32, #tpu.memory_space<smem>>
      %c0_i32_106 = arith.constant 0 : i32
      %c0_i32_107 = arith.constant 0 : i32
      %c4_i32_108 = arith.constant 4 : i32
      %c0_i32_109 = arith.constant 0 : i32
      %144 = tpu.memref_slice %arg2[%143, %c0_i32_109] : memref<64x256xf32, #tpu.memory_space<any>> -> memref<1x256xf32, #tpu.memory_space<any>>
      %c4_i32_110 = arith.constant 4 : i32
      %c0_i32_111 = arith.constant 0 : i32
      %145 = tpu.memref_slice %arg11[%c0_i32_106, %c4_i32_110, %c0_i32_111] : memref<2x8x256xf32, #tpu.memory_space<vmem>> -> memref<1x1x256xf32, #tpu.memory_space<vmem>>
      %146 = tpu.memref_squeeze %145 : memref<1x1x256xf32, #tpu.memory_space<vmem>> -> memref<1x256xf32, #tpu.memory_space<vmem>>
      %147 = tpu.memref_slice %arg12[%c0_i32_107, %c4_i32_108] : memref<2x8x!tpu.dma_semaphore, #tpu.memory_space<semaphore_mem>> -> memref<1x1x!tpu.dma_semaphore, #tpu.memory_space<semaphore_mem>>
      %148 = tpu.memref_squeeze %147 : memref<1x1x!tpu.dma_semaphore, #tpu.memory_space<semaphore_mem>> -> memref<!tpu.dma_semaphore, #tpu.memory_space<semaphore_mem>>
      tpu.enqueue_dma source(%144 : memref<1x256xf32, #tpu.memory_space<any>>) target(%146 : memref<1x256xf32, #tpu.memory_space<vmem>>) target_semaphore(%148 : memref<!tpu.dma_semaphore, #tpu.memory_space<semaphore_mem>>)
      %c0_112 = arith.constant 0 : index
      %c5 = arith.constant 5 : index
      %149 = memref.load %arg1[%c0_112, %c5] : memref<6x8xi32, #tpu.memory_space<smem>>
      %c0_i32_113 = arith.constant 0 : i32
      %c0_i32_114 = arith.constant 0 : i32
      %c5_i32_115 = arith.constant 5 : i32
      %c0_i32_116 = arith.constant 0 : i32
      %150 = tpu.memref_slice %arg2[%149, %c0_i32_116] : memref<64x256xf32, #tpu.memory_space<any>> -> memref<1x256xf32, #tpu.memory_space<any>>
      %c5_i32_117 = arith.constant 5 : i32
      %c0_i32_118 = arith.constant 0 : i32
      %151 = tpu.memref_slice %arg11[%c0_i32_113, %c5_i32_117, %c0_i32_118] : memref<2x8x256xf32, #tpu.memory_space<vmem>> -> memref<1x1x256xf32, #tpu.memory_space<vmem>>
      %152 = tpu.memref_squeeze %151 : memref<1x1x256xf32, #tpu.memory_space<vmem>> -> memref<1x256xf32, #tpu.memory_space<vmem>>
      %153 = tpu.memref_slice %arg12[%c0_i32_114, %c5_i32_115] : memref<2x8x!tpu.dma_semaphore, #tpu.memory_space<semaphore_mem>> -> memref<1x1x!tpu.dma_semaphore, #tpu.memory_space<semaphore_mem>>
      %154 = tpu.memref_squeeze %153 : memref<1x1x!tpu.dma_semaphore, #tpu.memory_space<semaphore_mem>> -> memref<!tpu.dma_semaphore, #tpu.memory_space<semaphore_mem>>
      tpu.enqueue_dma source(%150 : memref<1x256xf32, #tpu.memory_space<any>>) target(%152 : memref<1x256xf32, #tpu.memory_space<vmem>>) target_semaphore(%154 : memref<!tpu.dma_semaphore, #tpu.memory_space<semaphore_mem>>)
      %c0_119 = arith.constant 0 : index
      %c6 = arith.constant 6 : index
      %155 = memref.load %arg1[%c0_119, %c6] : memref<6x8xi32, #tpu.memory_space<smem>>
      %c0_i32_120 = arith.constant 0 : i32
      %c0_i32_121 = arith.constant 0 : i32
      %c6_i32_122 = arith.constant 6 : i32
      %c0_i32_123 = arith.constant 0 : i32
      %156 = tpu.memref_slice %arg2[%155, %c0_i32_123] : memref<64x256xf32, #tpu.memory_space<any>> -> memref<1x256xf32, #tpu.memory_space<any>>
      %c6_i32_124 = arith.constant 6 : i32
      %c0_i32_125 = arith.constant 0 : i32
      %157 = tpu.memref_slice %arg11[%c0_i32_120, %c6_i32_124, %c0_i32_125] : memref<2x8x256xf32, #tpu.memory_space<vmem>> -> memref<1x1x256xf32, #tpu.memory_space<vmem>>
      %158 = tpu.memref_squeeze %157 : memref<1x1x256xf32, #tpu.memory_space<vmem>> -> memref<1x256xf32, #tpu.memory_space<vmem>>
      %159 = tpu.memref_slice %arg12[%c0_i32_121, %c6_i32_122] : memref<2x8x!tpu.dma_semaphore, #tpu.memory_space<semaphore_mem>> -> memref<1x1x!tpu.dma_semaphore, #tpu.memory_space<semaphore_mem>>
      %160 = tpu.memref_squeeze %159 : memref<1x1x!tpu.dma_semaphore, #tpu.memory_space<semaphore_mem>> -> memref<!tpu.dma_semaphore, #tpu.memory_space<semaphore_mem>>
      tpu.enqueue_dma source(%156 : memref<1x256xf32, #tpu.memory_space<any>>) target(%158 : memref<1x256xf32, #tpu.memory_space<vmem>>) target_semaphore(%160 : memref<!tpu.dma_semaphore, #tpu.memory_space<semaphore_mem>>)
      %c0_126 = arith.constant 0 : index
      %c7 = arith.constant 7 : index
      %161 = memref.load %arg1[%c0_126, %c7] : memref<6x8xi32, #tpu.memory_space<smem>>
      %c0_i32_127 = arith.constant 0 : i32
      %c0_i32_128 = arith.constant 0 : i32
      %c7_i32_129 = arith.constant 7 : i32
      %c0_i32_130 = arith.constant 0 : i32
      %162 = tpu.memref_slice %arg2[%161, %c0_i32_130] : memref<64x256xf32, #tpu.memory_space<any>> -> memref<1x256xf32, #tpu.memory_space<any>>
      %c7_i32_131 = arith.constant 7 : i32
      %c0_i32_132 = arith.constant 0 : i32
      %163 = tpu.memref_slice %arg11[%c0_i32_127, %c7_i32_131, %c0_i32_132] : memref<2x8x256xf32, #tpu.memory_space<vmem>> -> memref<1x1x256xf32, #tpu.memory_space<vmem>>
      %164 = tpu.memref_squeeze %163 : memref<1x1x256xf32, #tpu.memory_space<vmem>> -> memref<1x256xf32, #tpu.memory_space<vmem>>
      %165 = tpu.memref_slice %arg12[%c0_i32_128, %c7_i32_129] : memref<2x8x!tpu.dma_semaphore, #tpu.memory_space<semaphore_mem>> -> memref<1x1x!tpu.dma_semaphore, #tpu.memory_space<semaphore_mem>>
      %166 = tpu.memref_squeeze %165 : memref<1x1x!tpu.dma_semaphore, #tpu.memory_space<semaphore_mem>> -> memref<!tpu.dma_semaphore, #tpu.memory_space<semaphore_mem>>
      tpu.enqueue_dma source(%162 : memref<1x256xf32, #tpu.memory_space<any>>) target(%164 : memref<1x256xf32, #tpu.memory_space<vmem>>) target_semaphore(%166 : memref<!tpu.dma_semaphore, #tpu.memory_space<semaphore_mem>>)
    } else {
    }
    %c2_i32 = arith.constant 2 : i32
    %c0_i32_1 = arith.constant 0 : i32
    %3 = arith.cmpi eq, %c2_i32, %c0_i32_1 : i32
    %c1_i32 = arith.constant 1 : i32
    %4 = arith.select %3, %c1_i32, %c2_i32 : i32
    %5 = arith.remsi %arg0, %4 : i32
    %c0_i32_2 = arith.constant 0 : i32
    %6 = arith.cmpi ne, %5, %c0_i32_2 : i32
    %c0_i32_3 = arith.constant 0 : i32
    %7 = arith.cmpi slt, %5, %c0_i32_3 : i32
    %c0_i32_4 = arith.constant 0 : i32
    %8 = arith.cmpi slt, %4, %c0_i32_4 : i32
    %9 = arith.xori %7, %8 : i1
    %10 = arith.andi %9, %6 : i1
    %11 = arith.addi %5, %4 : i32
    %12 = arith.select %10, %11, %5 : i32
    %c0_i32_5 = arith.constant 0 : i32
    %c0_i32_6 = arith.constant 0 : i32
    %c0_i32_7 = arith.constant 0 : i32
    %13 = tpu.memref_slice %arg2[%c0_i32_6, %c0_i32_7] : memref<64x256xf32, #tpu.memory_space<any>> -> memref<1x256xf32, #tpu.memory_space<any>>
    %c0_i32_8 = arith.constant 0 : i32
    %c0_i32_9 = arith.constant 0 : i32
    %14 = tpu.memref_slice %arg11[%12, %c0_i32_8, %c0_i32_9] : memref<2x8x256xf32, #tpu.memory_space<vmem>> -> memref<1x1x256xf32, #tpu.memory_space<vmem>>
    %15 = tpu.memref_squeeze %14 : memref<1x1x256xf32, #tpu.memory_space<vmem>> -> memref<1x256xf32, #tpu.memory_space<vmem>>
    %16 = tpu.memref_slice %arg12[%12, %c0_i32_5] : memref<2x8x!tpu.dma_semaphore, #tpu.memory_space<semaphore_mem>> -> memref<1x1x!tpu.dma_semaphore, #tpu.memory_space<semaphore_mem>>
    %17 = tpu.memref_squeeze %16 : memref<1x1x!tpu.dma_semaphore, #tpu.memory_space<semaphore_mem>> -> memref<!tpu.dma_semaphore, #tpu.memory_space<semaphore_mem>>
    tpu.wait_dma2 semaphore(%17 : memref<!tpu.dma_semaphore, #tpu.memory_space<semaphore_mem>>) src(%13 : memref<1x256xf32, #tpu.memory_space<any>>) dst(%15 : memref<1x256xf32, #tpu.memory_space<vmem>>)
    %c1_i32_10 = arith.constant 1 : i32
    %c0_i32_11 = arith.constant 0 : i32
    %c0_i32_12 = arith.constant 0 : i32
    %18 = tpu.memref_slice %arg2[%c0_i32_11, %c0_i32_12] : memref<64x256xf32, #tpu.memory_space<any>> -> memref<1x256xf32, #tpu.memory_space<any>>
    %c1_i32_13 = arith.constant 1 : i32
    %c0_i32_14 = arith.constant 0 : i32
    %19 = tpu.memref_slice %arg11[%12, %c1_i32_13, %c0_i32_14] : memref<2x8x256xf32, #tpu.memory_space<vmem>> -> memref<1x1x256xf32, #tpu.memory_space<vmem>>
    %20 = tpu.memref_squeeze %19 : memref<1x1x256xf32, #tpu.memory_space<vmem>> -> memref<1x256xf32, #tpu.memory_space<vmem>>
    %21 = tpu.memref_slice %arg12[%12, %c1_i32_10] : memref<2x8x!tpu.dma_semaphore, #tpu.memory_space<semaphore_mem>> -> memref<1x1x!tpu.dma_semaphore, #tpu.memory_space<semaphore_mem>>
    %22 = tpu.memref_squeeze %21 : memref<1x1x!tpu.dma_semaphore, #tpu.memory_space<semaphore_mem>> -> memref<!tpu.dma_semaphore, #tpu.memory_space<semaphore_mem>>
    tpu.wait_dma2 semaphore(%22 : memref<!tpu.dma_semaphore, #tpu.memory_space<semaphore_mem>>) src(%18 : memref<1x256xf32, #tpu.memory_space<any>>) dst(%20 : memref<1x256xf32, #tpu.memory_space<vmem>>)
    %c2_i32_15 = arith.constant 2 : i32
    %c0_i32_16 = arith.constant 0 : i32
    %c0_i32_17 = arith.constant 0 : i32
    %23 = tpu.memref_slice %arg2[%c0_i32_16, %c0_i32_17] : memref<64x256xf32, #tpu.memory_space<any>> -> memref<1x256xf32, #tpu.memory_space<any>>
    %c2_i32_18 = arith.constant 2 : i32
    %c0_i32_19 = arith.constant 0 : i32
    %24 = tpu.memref_slice %arg11[%12, %c2_i32_18, %c0_i32_19] : memref<2x8x256xf32, #tpu.memory_space<vmem>> -> memref<1x1x256xf32, #tpu.memory_space<vmem>>
    %25 = tpu.memref_squeeze %24 : memref<1x1x256xf32, #tpu.memory_space<vmem>> -> memref<1x256xf32, #tpu.memory_space<vmem>>
    %26 = tpu.memref_slice %arg12[%12, %c2_i32_15] : memref<2x8x!tpu.dma_semaphore, #tpu.memory_space<semaphore_mem>> -> memref<1x1x!tpu.dma_semaphore, #tpu.memory_space<semaphore_mem>>
    %27 = tpu.memref_squeeze %26 : memref<1x1x!tpu.dma_semaphore, #tpu.memory_space<semaphore_mem>> -> memref<!tpu.dma_semaphore, #tpu.memory_space<semaphore_mem>>
    tpu.wait_dma2 semaphore(%27 : memref<!tpu.dma_semaphore, #tpu.memory_space<semaphore_mem>>) src(%23 : memref<1x256xf32, #tpu.memory_space<any>>) dst(%25 : memref<1x256xf32, #tpu.memory_space<vmem>>)
    %c3_i32 = arith.constant 3 : i32
    %c0_i32_20 = arith.constant 0 : i32
    %c0_i32_21 = arith.constant 0 : i32
    %28 = tpu.memref_slice %arg2[%c0_i32_20, %c0_i32_21] : memref<64x256xf32, #tpu.memory_space<any>> -> memref<1x256xf32, #tpu.memory_space<any>>
    %c3_i32_22 = arith.constant 3 : i32
    %c0_i32_23 = arith.constant 0 : i32
    %29 = tpu.memref_slice %arg11[%12, %c3_i32_22, %c0_i32_23] : memref<2x8x256xf32, #tpu.memory_space<vmem>> -> memref<1x1x256xf32, #tpu.memory_space<vmem>>
    %30 = tpu.memref_squeeze %29 : memref<1x1x256xf32, #tpu.memory_space<vmem>> -> memref<1x256xf32, #tpu.memory_space<vmem>>
    %31 = tpu.memref_slice %arg12[%12, %c3_i32] : memref<2x8x!tpu.dma_semaphore, #tpu.memory_space<semaphore_mem>> -> memref<1x1x!tpu.dma_semaphore, #tpu.memory_space<semaphore_mem>>
    %32 = tpu.memref_squeeze %31 : memref<1x1x!tpu.dma_semaphore, #tpu.memory_space<semaphore_mem>> -> memref<!tpu.dma_semaphore, #tpu.memory_space<semaphore_mem>>
    tpu.wait_dma2 semaphore(%32 : memref<!tpu.dma_semaphore, #tpu.memory_space<semaphore_mem>>) src(%28 : memref<1x256xf32, #tpu.memory_space<any>>) dst(%30 : memref<1x256xf32, #tpu.memory_space<vmem>>)
    %c4_i32 = arith.constant 4 : i32
    %c0_i32_24 = arith.constant 0 : i32
    %c0_i32_25 = arith.constant 0 : i32
    %33 = tpu.memref_slice %arg2[%c0_i32_24, %c0_i32_25] : memref<64x256xf32, #tpu.memory_space<any>> -> memref<1x256xf32, #tpu.memory_space<any>>
    %c4_i32_26 = arith.constant 4 : i32
    %c0_i32_27 = arith.constant 0 : i32
    %34 = tpu.memref_slice %arg11[%12, %c4_i32_26, %c0_i32_27] : memref<2x8x256xf32, #tpu.memory_space<vmem>> -> memref<1x1x256xf32, #tpu.memory_space<vmem>>
    %35 = tpu.memref_squeeze %34 : memref<1x1x256xf32, #tpu.memory_space<vmem>> -> memref<1x256xf32, #tpu.memory_space<vmem>>
    %36 = tpu.memref_slice %arg12[%12, %c4_i32] : memref<2x8x!tpu.dma_semaphore, #tpu.memory_space<semaphore_mem>> -> memref<1x1x!tpu.dma_semaphore, #tpu.memory_space<semaphore_mem>>
    %37 = tpu.memref_squeeze %36 : memref<1x1x!tpu.dma_semaphore, #tpu.memory_space<semaphore_mem>> -> memref<!tpu.dma_semaphore, #tpu.memory_space<semaphore_mem>>
    tpu.wait_dma2 semaphore(%37 : memref<!tpu.dma_semaphore, #tpu.memory_space<semaphore_mem>>) src(%33 : memref<1x256xf32, #tpu.memory_space<any>>) dst(%35 : memref<1x256xf32, #tpu.memory_space<vmem>>)
    %c5_i32 = arith.constant 5 : i32
    %c0_i32_28 = arith.constant 0 : i32
    %c0_i32_29 = arith.constant 0 : i32
    %38 = tpu.memref_slice %arg2[%c0_i32_28, %c0_i32_29] : memref<64x256xf32, #tpu.memory_space<any>> -> memref<1x256xf32, #tpu.memory_space<any>>
    %c5_i32_30 = arith.constant 5 : i32
    %c0_i32_31 = arith.constant 0 : i32
    %39 = tpu.memref_slice %arg11[%12, %c5_i32_30, %c0_i32_31] : memref<2x8x256xf32, #tpu.memory_space<vmem>> -> memref<1x1x256xf32, #tpu.memory_space<vmem>>
    %40 = tpu.memref_squeeze %39 : memref<1x1x256xf32, #tpu.memory_space<vmem>> -> memref<1x256xf32, #tpu.memory_space<vmem>>
    %41 = tpu.memref_slice %arg12[%12, %c5_i32] : memref<2x8x!tpu.dma_semaphore, #tpu.memory_space<semaphore_mem>> -> memref<1x1x!tpu.dma_semaphore, #tpu.memory_space<semaphore_mem>>
    %42 = tpu.memref_squeeze %41 : memref<1x1x!tpu.dma_semaphore, #tpu.memory_space<semaphore_mem>> -> memref<!tpu.dma_semaphore, #tpu.memory_space<semaphore_mem>>
    tpu.wait_dma2 semaphore(%42 : memref<!tpu.dma_semaphore, #tpu.memory_space<semaphore_mem>>) src(%38 : memref<1x256xf32, #tpu.memory_space<any>>) dst(%40 : memref<1x256xf32, #tpu.memory_space<vmem>>)
    %c6_i32 = arith.constant 6 : i32
    %c0_i32_32 = arith.constant 0 : i32
    %c0_i32_33 = arith.constant 0 : i32
    %43 = tpu.memref_slice %arg2[%c0_i32_32, %c0_i32_33] : memref<64x256xf32, #tpu.memory_space<any>> -> memref<1x256xf32, #tpu.memory_space<any>>
    %c6_i32_34 = arith.constant 6 : i32
    %c0_i32_35 = arith.constant 0 : i32
    %44 = tpu.memref_slice %arg11[%12, %c6_i32_34, %c0_i32_35] : memref<2x8x256xf32, #tpu.memory_space<vmem>> -> memref<1x1x256xf32, #tpu.memory_space<vmem>>
    %45 = tpu.memref_squeeze %44 : memref<1x1x256xf32, #tpu.memory_space<vmem>> -> memref<1x256xf32, #tpu.memory_space<vmem>>
    %46 = tpu.memref_slice %arg12[%12, %c6_i32] : memref<2x8x!tpu.dma_semaphore, #tpu.memory_space<semaphore_mem>> -> memref<1x1x!tpu.dma_semaphore, #tpu.memory_space<semaphore_mem>>
    %47 = tpu.memref_squeeze %46 : memref<1x1x!tpu.dma_semaphore, #tpu.memory_space<semaphore_mem>> -> memref<!tpu.dma_semaphore, #tpu.memory_space<semaphore_mem>>
    tpu.wait_dma2 semaphore(%47 : memref<!tpu.dma_semaphore, #tpu.memory_space<semaphore_mem>>) src(%43 : memref<1x256xf32, #tpu.memory_space<any>>) dst(%45 : memref<1x256xf32, #tpu.memory_space<vmem>>)
    %c7_i32 = arith.constant 7 : i32
    %c0_i32_36 = arith.constant 0 : i32
    %c0_i32_37 = arith.constant 0 : i32
    %48 = tpu.memref_slice %arg2[%c0_i32_36, %c0_i32_37] : memref<64x256xf32, #tpu.memory_space<any>> -> memref<1x256xf32, #tpu.memory_space<any>>
    %c7_i32_38 = arith.constant 7 : i32
    %c0_i32_39 = arith.constant 0 : i32
    %49 = tpu.memref_slice %arg11[%12, %c7_i32_38, %c0_i32_39] : memref<2x8x256xf32, #tpu.memory_space<vmem>> -> memref<1x1x256xf32, #tpu.memory_space<vmem>>
    %50 = tpu.memref_squeeze %49 : memref<1x1x256xf32, #tpu.memory_space<vmem>> -> memref<1x256xf32, #tpu.memory_space<vmem>>
    %51 = tpu.memref_slice %arg12[%12, %c7_i32] : memref<2x8x!tpu.dma_semaphore, #tpu.memory_space<semaphore_mem>> -> memref<1x1x!tpu.dma_semaphore, #tpu.memory_space<semaphore_mem>>
    %52 = tpu.memref_squeeze %51 : memref<1x1x!tpu.dma_semaphore, #tpu.memory_space<semaphore_mem>> -> memref<!tpu.dma_semaphore, #tpu.memory_space<semaphore_mem>>
    tpu.wait_dma2 semaphore(%52 : memref<!tpu.dma_semaphore, #tpu.memory_space<semaphore_mem>>) src(%48 : memref<1x256xf32, #tpu.memory_space<any>>) dst(%50 : memref<1x256xf32, #tpu.memory_space<vmem>>)
    %c1_i32_40 = arith.constant 1 : i32
    %53 = arith.addi %arg0, %c1_i32_40 : i32
    %c6_i32_41 = arith.constant 6 : i32
    %54 = arith.cmpi slt, %53, %c6_i32_41 : i32
    %55 = arith.extui %54 : i1 to i32
    %c0_i32_42 = arith.constant 0 : i32
    %56 = arith.cmpi ne, %55, %c0_i32_42 : i32
    scf.if %56 {
      %c1_i32_64 = arith.constant 1 : i32
      %105 = arith.addi %arg0, %c1_i32_64 : i32
      %c1_i32_65 = arith.constant 1 : i32
      %106 = arith.subi %c1_i32_65, %12 : i32
      %107 = arith.index_cast %105 : i32 to index
      %c0_66 = arith.constant 0 : index
      %108 = memref.load %arg1[%107, %c0_66] : memref<6x8xi32, #tpu.memory_space<smem>>
      %c0_i32_67 = arith.constant 0 : i32
      %c0_i32_68 = arith.constant 0 : i32
      %109 = tpu.memref_slice %arg2[%108, %c0_i32_68] : memref<64x256xf32, #tpu.memory_space<any>> -> memref<1x256xf32, #tpu.memory_space<any>>
      %c0_i32_69 = arith.constant 0 : i32
      %c0_i32_70 = arith.constant 0 : i32
      %110 = tpu.memref_slice %arg11[%106, %c0_i32_69, %c0_i32_70] : memref<2x8x256xf32, #tpu.memory_space<vmem>> -> memref<1x1x256xf32, #tpu.memory_space<vmem>>
      %111 = tpu.memref_squeeze %110 : memref<1x1x256xf32, #tpu.memory_space<vmem>> -> memref<1x256xf32, #tpu.memory_space<vmem>>
      %112 = tpu.memref_slice %arg12[%106, %c0_i32_67] : memref<2x8x!tpu.dma_semaphore, #tpu.memory_space<semaphore_mem>> -> memref<1x1x!tpu.dma_semaphore, #tpu.memory_space<semaphore_mem>>
      %113 = tpu.memref_squeeze %112 : memref<1x1x!tpu.dma_semaphore, #tpu.memory_space<semaphore_mem>> -> memref<!tpu.dma_semaphore, #tpu.memory_space<semaphore_mem>>
      tpu.enqueue_dma source(%109 : memref<1x256xf32, #tpu.memory_space<any>>) target(%111 : memref<1x256xf32, #tpu.memory_space<vmem>>) target_semaphore(%113 : memref<!tpu.dma_semaphore, #tpu.memory_space<semaphore_mem>>)
      %114 = arith.index_cast %105 : i32 to index
      %c1 = arith.constant 1 : index
      %115 = memref.load %arg1[%114, %c1] : memref<6x8xi32, #tpu.memory_space<smem>>
      %c1_i32_71 = arith.constant 1 : i32
      %c0_i32_72 = arith.constant 0 : i32
      %116 = tpu.memref_slice %arg2[%115, %c0_i32_72] : memref<64x256xf32, #tpu.memory_space<any>> -> memref<1x256xf32, #tpu.memory_space<any>>
      %c1_i32_73 = arith.constant 1 : i32
      %c0_i32_74 = arith.constant 0 : i32
      %117 = tpu.memref_slice %arg11[%106, %c1_i32_73, %c0_i32_74] : memref<2x8x256xf32, #tpu.memory_space<vmem>> -> memref<1x1x256xf32, #tpu.memory_space<vmem>>
      %118 = tpu.memref_squeeze %117 : memref<1x1x256xf32, #tpu.memory_space<vmem>> -> memref<1x256xf32, #tpu.memory_space<vmem>>
      %119 = tpu.memref_slice %arg12[%106, %c1_i32_71] : memref<2x8x!tpu.dma_semaphore, #tpu.memory_space<semaphore_mem>> -> memref<1x1x!tpu.dma_semaphore, #tpu.memory_space<semaphore_mem>>
      %120 = tpu.memref_squeeze %119 : memref<1x1x!tpu.dma_semaphore, #tpu.memory_space<semaphore_mem>> -> memref<!tpu.dma_semaphore, #tpu.memory_space<semaphore_mem>>
      tpu.enqueue_dma source(%116 : memref<1x256xf32, #tpu.memory_space<any>>) target(%118 : memref<1x256xf32, #tpu.memory_space<vmem>>) target_semaphore(%120 : memref<!tpu.dma_semaphore, #tpu.memory_space<semaphore_mem>>)
      %121 = arith.index_cast %105 : i32 to index
      %c2 = arith.constant 2 : index
      %122 = memref.load %arg1[%121, %c2] : memref<6x8xi32, #tpu.memory_space<smem>>
      %c2_i32_75 = arith.constant 2 : i32
      %c0_i32_76 = arith.constant 0 : i32
      %123 = tpu.memref_slice %arg2[%122, %c0_i32_76] : memref<64x256xf32, #tpu.memory_space<any>> -> memref<1x256xf32, #tpu.memory_space<any>>
      %c2_i32_77 = arith.constant 2 : i32
      %c0_i32_78 = arith.constant 0 : i32
      %124 = tpu.memref_slice %arg11[%106, %c2_i32_77, %c0_i32_78] : memref<2x8x256xf32, #tpu.memory_space<vmem>> -> memref<1x1x256xf32, #tpu.memory_space<vmem>>
      %125 = tpu.memref_squeeze %124 : memref<1x1x256xf32, #tpu.memory_space<vmem>> -> memref<1x256xf32, #tpu.memory_space<vmem>>
      %126 = tpu.memref_slice %arg12[%106, %c2_i32_75] : memref<2x8x!tpu.dma_semaphore, #tpu.memory_space<semaphore_mem>> -> memref<1x1x!tpu.dma_semaphore, #tpu.memory_space<semaphore_mem>>
      %127 = tpu.memref_squeeze %126 : memref<1x1x!tpu.dma_semaphore, #tpu.memory_space<semaphore_mem>> -> memref<!tpu.dma_semaphore, #tpu.memory_space<semaphore_mem>>
      tpu.enqueue_dma source(%123 : memref<1x256xf32, #tpu.memory_space<any>>) target(%125 : memref<1x256xf32, #tpu.memory_space<vmem>>) target_semaphore(%127 : memref<!tpu.dma_semaphore, #tpu.memory_space<semaphore_mem>>)
      %128 = arith.index_cast %105 : i32 to index
      %c3 = arith.constant 3 : index
      %129 = memref.load %arg1[%128, %c3] : memref<6x8xi32, #tpu.memory_space<smem>>
      %c3_i32_79 = arith.constant 3 : i32
      %c0_i32_80 = arith.constant 0 : i32
      %130 = tpu.memref_slice %arg2[%129, %c0_i32_80] : memref<64x256xf32, #tpu.memory_space<any>> -> memref<1x256xf32, #tpu.memory_space<any>>
      %c3_i32_81 = arith.constant 3 : i32
      %c0_i32_82 = arith.constant 0 : i32
      %131 = tpu.memref_slice %arg11[%106, %c3_i32_81, %c0_i32_82] : memref<2x8x256xf32, #tpu.memory_space<vmem>> -> memref<1x1x256xf32, #tpu.memory_space<vmem>>
      %132 = tpu.memref_squeeze %131 : memref<1x1x256xf32, #tpu.memory_space<vmem>> -> memref<1x256xf32, #tpu.memory_space<vmem>>
      %133 = tpu.memref_slice %arg12[%106, %c3_i32_79] : memref<2x8x!tpu.dma_semaphore, #tpu.memory_space<semaphore_mem>> -> memref<1x1x!tpu.dma_semaphore, #tpu.memory_space<semaphore_mem>>
      %134 = tpu.memref_squeeze %133 : memref<1x1x!tpu.dma_semaphore, #tpu.memory_space<semaphore_mem>> -> memref<!tpu.dma_semaphore, #tpu.memory_space<semaphore_mem>>
      tpu.enqueue_dma source(%130 : memref<1x256xf32, #tpu.memory_space<any>>) target(%132 : memref<1x256xf32, #tpu.memory_space<vmem>>) target_semaphore(%134 : memref<!tpu.dma_semaphore, #tpu.memory_space<semaphore_mem>>)
      %135 = arith.index_cast %105 : i32 to index
      %c4 = arith.constant 4 : index
      %136 = memref.load %arg1[%135, %c4] : memref<6x8xi32, #tpu.memory_space<smem>>
      %c4_i32_83 = arith.constant 4 : i32
      %c0_i32_84 = arith.constant 0 : i32
      %137 = tpu.memref_slice %arg2[%136, %c0_i32_84] : memref<64x256xf32, #tpu.memory_space<any>> -> memref<1x256xf32, #tpu.memory_space<any>>
      %c4_i32_85 = arith.constant 4 : i32
      %c0_i32_86 = arith.constant 0 : i32
      %138 = tpu.memref_slice %arg11[%106, %c4_i32_85, %c0_i32_86] : memref<2x8x256xf32, #tpu.memory_space<vmem>> -> memref<1x1x256xf32, #tpu.memory_space<vmem>>
      %139 = tpu.memref_squeeze %138 : memref<1x1x256xf32, #tpu.memory_space<vmem>> -> memref<1x256xf32, #tpu.memory_space<vmem>>
      %140 = tpu.memref_slice %arg12[%106, %c4_i32_83] : memref<2x8x!tpu.dma_semaphore, #tpu.memory_space<semaphore_mem>> -> memref<1x1x!tpu.dma_semaphore, #tpu.memory_space<semaphore_mem>>
      %141 = tpu.memref_squeeze %140 : memref<1x1x!tpu.dma_semaphore, #tpu.memory_space<semaphore_mem>> -> memref<!tpu.dma_semaphore, #tpu.memory_space<semaphore_mem>>
      tpu.enqueue_dma source(%137 : memref<1x256xf32, #tpu.memory_space<any>>) target(%139 : memref<1x256xf32, #tpu.memory_space<vmem>>) target_semaphore(%141 : memref<!tpu.dma_semaphore, #tpu.memory_space<semaphore_mem>>)
      %142 = arith.index_cast %105 : i32 to index
      %c5 = arith.constant 5 : index
      %143 = memref.load %arg1[%142, %c5] : memref<6x8xi32, #tpu.memory_space<smem>>
      %c5_i32_87 = arith.constant 5 : i32
      %c0_i32_88 = arith.constant 0 : i32
      %144 = tpu.memref_slice %arg2[%143, %c0_i32_88] : memref<64x256xf32, #tpu.memory_space<any>> -> memref<1x256xf32, #tpu.memory_space<any>>
      %c5_i32_89 = arith.constant 5 : i32
      %c0_i32_90 = arith.constant 0 : i32
      %145 = tpu.memref_slice %arg11[%106, %c5_i32_89, %c0_i32_90] : memref<2x8x256xf32, #tpu.memory_space<vmem>> -> memref<1x1x256xf32, #tpu.memory_space<vmem>>
      %146 = tpu.memref_squeeze %145 : memref<1x1x256xf32, #tpu.memory_space<vmem>> -> memref<1x256xf32, #tpu.memory_space<vmem>>
      %147 = tpu.memref_slice %arg12[%106, %c5_i32_87] : memref<2x8x!tpu.dma_semaphore, #tpu.memory_space<semaphore_mem>> -> memref<1x1x!tpu.dma_semaphore, #tpu.memory_space<semaphore_mem>>
      %148 = tpu.memref_squeeze %147 : memref<1x1x!tpu.dma_semaphore, #tpu.memory_space<semaphore_mem>> -> memref<!tpu.dma_semaphore, #tpu.memory_space<semaphore_mem>>
      tpu.enqueue_dma source(%144 : memref<1x256xf32, #tpu.memory_space<any>>) target(%146 : memref<1x256xf32, #tpu.memory_space<vmem>>) target_semaphore(%148 : memref<!tpu.dma_semaphore, #tpu.memory_space<semaphore_mem>>)
      %149 = arith.index_cast %105 : i32 to index
      %c6 = arith.constant 6 : index
      %150 = memref.load %arg1[%149, %c6] : memref<6x8xi32, #tpu.memory_space<smem>>
      %c6_i32_91 = arith.constant 6 : i32
      %c0_i32_92 = arith.constant 0 : i32
      %151 = tpu.memref_slice %arg2[%150, %c0_i32_92] : memref<64x256xf32, #tpu.memory_space<any>> -> memref<1x256xf32, #tpu.memory_space<any>>
      %c6_i32_93 = arith.constant 6 : i32
      %c0_i32_94 = arith.constant 0 : i32
      %152 = tpu.memref_slice %arg11[%106, %c6_i32_93, %c0_i32_94] : memref<2x8x256xf32, #tpu.memory_space<vmem>> -> memref<1x1x256xf32, #tpu.memory_space<vmem>>
      %153 = tpu.memref_squeeze %152 : memref<1x1x256xf32, #tpu.memory_space<vmem>> -> memref<1x256xf32, #tpu.memory_space<vmem>>
      %154 = tpu.memref_slice %arg12[%106, %c6_i32_91] : memref<2x8x!tpu.dma_semaphore, #tpu.memory_space<semaphore_mem>> -> memref<1x1x!tpu.dma_semaphore, #tpu.memory_space<semaphore_mem>>
      %155 = tpu.memref_squeeze %154 : memref<1x1x!tpu.dma_semaphore, #tpu.memory_space<semaphore_mem>> -> memref<!tpu.dma_semaphore, #tpu.memory_space<semaphore_mem>>
      tpu.enqueue_dma source(%151 : memref<1x256xf32, #tpu.memory_space<any>>) target(%153 : memref<1x256xf32, #tpu.memory_space<vmem>>) target_semaphore(%155 : memref<!tpu.dma_semaphore, #tpu.memory_space<semaphore_mem>>)
      %156 = arith.index_cast %105 : i32 to index
      %c7 = arith.constant 7 : index
      %157 = memref.load %arg1[%156, %c7] : memref<6x8xi32, #tpu.memory_space<smem>>
      %c7_i32_95 = arith.constant 7 : i32
      %c0_i32_96 = arith.constant 0 : i32
      %158 = tpu.memref_slice %arg2[%157, %c0_i32_96] : memref<64x256xf32, #tpu.memory_space<any>> -> memref<1x256xf32, #tpu.memory_space<any>>
      %c7_i32_97 = arith.constant 7 : i32
      %c0_i32_98 = arith.constant 0 : i32
      %159 = tpu.memref_slice %arg11[%106, %c7_i32_97, %c0_i32_98] : memref<2x8x256xf32, #tpu.memory_space<vmem>> -> memref<1x1x256xf32, #tpu.memory_space<vmem>>
      %160 = tpu.memref_squeeze %159 : memref<1x1x256xf32, #tpu.memory_space<vmem>> -> memref<1x256xf32, #tpu.memory_space<vmem>>
      %161 = tpu.memref_slice %arg12[%106, %c7_i32_95] : memref<2x8x!tpu.dma_semaphore, #tpu.memory_space<semaphore_mem>> -> memref<1x1x!tpu.dma_semaphore, #tpu.memory_space<semaphore_mem>>
      %162 = tpu.memref_squeeze %161 : memref<1x1x!tpu.dma_semaphore, #tpu.memory_space<semaphore_mem>> -> memref<!tpu.dma_semaphore, #tpu.memory_space<semaphore_mem>>
      tpu.enqueue_dma source(%158 : memref<1x256xf32, #tpu.memory_space<any>>) target(%160 : memref<1x256xf32, #tpu.memory_space<vmem>>) target_semaphore(%162 : memref<!tpu.dma_semaphore, #tpu.memory_space<semaphore_mem>>)
    } else {
    }
    %c0 = arith.constant 0 : index
    %c0_43 = arith.constant 0 : index
    %57 = vector.load %arg8[%c0, %c0_43] : memref<8x64xf32, #tpu.memory_space<vmem>>, vector<8x64xf32>
    %c0_44 = arith.constant 0 : index
    %c0_45 = arith.constant 0 : index
    %58 = vector.load %arg9[%c0_44, %c0_45] : memref<8x64xf32, #tpu.memory_space<vmem>>, vector<8x64xf32>
    %59 = arith.index_cast %12 : i32 to index
    %c0_46 = arith.constant 0 : index
    %c0_47 = arith.constant 0 : index
    %60 = vector.load %arg11[%59, %c0_46, %c0_47] : memref<2x8x256xf32, #tpu.memory_space<vmem>>, vector<1x8x256xf32>
    %61 = vector.shape_cast %60 : vector<1x8x256xf32> to vector<8x256xf32>
    %c0_48 = arith.constant 0 : index
    %c0_49 = arith.constant 0 : index
    %62 = vector.load %arg3[%c0_48, %c0_49] : memref<64x256xf32, #tpu.memory_space<vmem>>, vector<64x256xf32>
    %cst = arith.constant dense<0.000000e+00> : vector<8x256xf32>
    %63 = tpu.matmul %57, %62, %cst {dimension_numbers = #tpu.dot_dimension_numbers<[1], [0], [0], [1], [0, 0, 1, 1], [], []>} : vector<8x64xf32>, vector<64x256xf32>, vector<8x256xf32> -> vector<8x256xf32>
    %64 = arith.addf %61, %63 : vector<8x256xf32>
    %c0_50 = arith.constant 0 : index
    %c0_51 = arith.constant 0 : index
    %65 = vector.load %arg10[%c0_50, %c0_51] : memref<1x256xf32, #tpu.memory_space<vmem>>, vector<1x256xf32>
    %66 = vector.broadcast %65 : vector<1x256xf32> to vector<8x256xf32>
    %67 = arith.mulf %64, %66 : vector<8x256xf32>
    %68 = math.tanh %67 : vector<8x256xf32>
    %69 = vector.broadcast %65 : vector<1x256xf32> to vector<8x256xf32>
    %70 = arith.mulf %68, %69 : vector<8x256xf32>
    %cst_52 = arith.constant 1.000000e+00 : f32
    %71 = vector.broadcast %cst_52 : f32 to vector<1x256xf32>
    %72 = arith.subf %71, %65 : vector<1x256xf32>
    %73 = vector.broadcast %72 : vector<1x256xf32> to vector<8x256xf32>
    %74 = arith.addf %70, %73 : vector<8x256xf32>
    %75 = vector.extract_strided_slice %74 {offsets = [0, 0], sizes = [8, 64], strides = [1, 1]} : vector<8x256xf32> to vector<8x64xf32>
    %76 = vector.extract_strided_slice %74 {offsets = [0, 64], sizes = [8, 64], strides = [1, 1]} : vector<8x256xf32> to vector<8x64xf32>
    %77 = vector.extract_strided_slice %74 {offsets = [0, 128], sizes = [8, 64], strides = [1, 1]} : vector<8x256xf32> to vector<8x64xf32>
    %78 = vector.extract_strided_slice %74 {offsets = [0, 192], sizes = [8, 64], strides = [1, 1]} : vector<8x256xf32> to vector<8x64xf32>
    %79 = arith.mulf %76, %58 : vector<8x64xf32>
    %80 = arith.mulf %75, %77 : vector<8x64xf32>
    %81 = arith.addf %79, %80 : vector<8x64xf32>
    %82 = math.tanh %81 : vector<8x64xf32>
    %83 = arith.mulf %78, %82 : vector<8x64xf32>
    %c0_53 = arith.constant 0 : index
    %c0_54 = arith.constant 0 : index
    %c0_55 = arith.constant 0 : index
    %84 = vector.load %arg6[%c0_53, %c0_54, %c0_55] : memref<1x8x1xf32, #tpu.memory_space<vmem>>, vector<1x8x1xf32>
    %85 = vector.shape_cast %84 : vector<1x8x1xf32> to vector<8x1xf32>
    %86 = vector.broadcast %85 : vector<8x1xf32> to vector<8x64xf32>
    %87 = arith.mulf %86, %57 : vector<8x64xf32>
    %cst_56 = arith.constant 1.000000e+00 : f32
    %88 = vector.broadcast %cst_56 : f32 to vector<8x1xf32>
    %89 = arith.subf %88, %85 : vector<8x1xf32>
    %90 = vector.broadcast %89 : vector<8x1xf32> to vector<8x64xf32>
    %91 = arith.mulf %90, %83 : vector<8x64xf32>
    %92 = arith.addf %87, %91 : vector<8x64xf32>
    %c0_57 = arith.constant 0 : index
    %c0_58 = arith.constant 0 : index
    %93 = vector.load %arg8[%c0_57, %c0_58] : memref<8x64xf32, #tpu.memory_space<vmem>>, vector<8x64xf32>
    tpu.vector_store %arg8[%c0_57, %c0_58], %92 {strides = array<i32>} : memref<8x64xf32, #tpu.memory_space<vmem>>, vector<8x64xf32>,
    %94 = vector.broadcast %85 : vector<8x1xf32> to vector<8x64xf32>
    %95 = arith.mulf %94, %58 : vector<8x64xf32>
    %cst_59 = arith.constant 1.000000e+00 : f32
    %96 = vector.broadcast %cst_59 : f32 to vector<8x1xf32>
    %97 = arith.subf %96, %85 : vector<8x1xf32>
    %98 = vector.broadcast %97 : vector<8x1xf32> to vector<8x64xf32>
    %99 = arith.mulf %98, %81 : vector<8x64xf32>
    %100 = arith.addf %95, %99 : vector<8x64xf32>
    %c0_60 = arith.constant 0 : index
    %c0_61 = arith.constant 0 : index
    %101 = vector.load %arg9[%c0_60, %c0_61] : memref<8x64xf32, #tpu.memory_space<vmem>>, vector<8x64xf32>
    tpu.vector_store %arg9[%c0_60, %c0_61], %100 {strides = array<i32>} : memref<8x64xf32, #tpu.memory_space<vmem>>, vector<8x64xf32>,
    %c5_i32_62 = arith.constant 5 : i32
    %102 = arith.cmpi eq, %arg0, %c5_i32_62 : i32
    %103 = arith.extui %102 : i1 to i32
    %c0_i32_63 = arith.constant 0 : i32
    %104 = arith.cmpi ne, %103, %c0_i32_63 : i32
    scf.if %104 {
      %c0_64 = arith.constant 0 : index
      %c0_65 = arith.constant 0 : index
      %105 = vector.load %arg8[%c0_64, %c0_65] : memref<8x64xf32, #tpu.memory_space<vmem>>, vector<8x64xf32>
      %c0_66 = arith.constant 0 : index
      %c0_67 = arith.constant 0 : index
      %106 = vector.load %arg7[%c0_66, %c0_67] : memref<8x128xf32, #tpu.memory_space<vmem>>, vector<8x64xf32>
      tpu.vector_store %arg7[%c0_66, %c0_67], %105 {strides = array<i32>} : memref<8x128xf32, #tpu.memory_space<vmem>>, vector<8x64xf32>,
      %c0_68 = arith.constant 0 : index
      %c0_69 = arith.constant 0 : index
      %107 = vector.load %arg9[%c0_68, %c0_69] : memref<8x64xf32, #tpu.memory_space<vmem>>, vector<8x64xf32>
      %c0_70 = arith.constant 0 : index
      %c64 = arith.constant 64 : index
      %108 = vector.load %arg7[%c0_70, %c64] : memref<8x128xf32, #tpu.memory_space<vmem>>, vector<8x64xf32>
      tpu.vector_store %arg7[%c0_70, %c64], %107 {strides = array<i32>} : memref<8x128xf32, #tpu.memory_space<vmem>>, vector<8x64xf32>,
    } else {
    }
    return
  }
  func.func @transform_1(%arg0: i32, %arg1: memref<6x8xi32, #tpu.memory_space<smem>>) -> (i32, i32) {
    %c0_i32 = arith.constant 0 : i32
    %c0_i32_0 = arith.constant 0 : i32
    %c0_i32_1 = arith.constant 0 : i32
    return %c0_i32, %c0_i32_0 : i32, i32
  }
  func.func @transform_2(%arg0: i32, %arg1: memref<6x8xi32, #tpu.memory_space<smem>>) -> (i32, i32) {
    %c0_i32 = arith.constant 0 : i32
    %c0_i32_0 = arith.constant 0 : i32
    %c0_i32_1 = arith.constant 0 : i32
    return %c0_i32, %c0_i32_0 : i32, i32
  }
  func.func @transform_3(%arg0: i32, %arg1: memref<6x8xi32, #tpu.memory_space<smem>>) -> (i32, i32) {
    %c0_i32 = arith.constant 0 : i32
    %c0_i32_0 = arith.constant 0 : i32
    %c0_i32_1 = arith.constant 0 : i32
    return %c0_i32, %c0_i32_0 : i32, i32
  }
  func.func @transform_4(%arg0: i32, %arg1: memref<6x8xi32, #tpu.memory_space<smem>>) -> (i32, i32, i32) {
    %c0_i32 = arith.constant 0 : i32
    %c0_i32_0 = arith.constant 0 : i32
    %c0_i32_1 = arith.constant 0 : i32
    return %arg0, %c0_i32, %c0_i32_0 : i32, i32, i32
  }
  func.func @transform_5(%arg0: i32, %arg1: memref<6x8xi32, #tpu.memory_space<smem>>) -> (i32, i32) {
    %c0_i32 = arith.constant 0 : i32
    %c0_i32_0 = arith.constant 0 : i32
    %c0_i32_1 = arith.constant 0 : i32
    return %c0_i32, %c0_i32_0 : i32, i32
  }
}

</mosaic_0001>

<llo_original>
// kernel: tpu_custom_call.1
$region0: #{tpu_custom_call.1}
  #allocation0 [shape = 'u32[]', space=smem, size = 0x4, offset = 0x4, fixed_abs, tag = 'smem constant byte address 0x4 - core index']
  #allocation1 [shape = 'u32[144,128]{1,0:T(1,128)}', space=vmem, size = 0x12000, scoped, tag = 'internal scratch']
  #allocation2 [shape = 'f32[8,64]{1,0:T(8,128)}', space=vmem, size = 0x1000, scoped, tag = 'scratch operand']
  #allocation3 [shape = 'f32[8,64]{1,0:T(8,128)}', space=vmem, size = 0x1000, scoped, tag = 'scratch operand']
  #allocation4 [shape = 'f32[1,256]{1,0:T(1,128)}', space=vmem, size = 0x400, scoped, tag = 'scratch operand']
  #allocation5 [shape = 'f32[2,8,256]{2,1,0:T(8,128)}', space=vmem, size = 0x4000, scoped, tag = 'scratch operand']
  #allocation6 [shape = 's32[16]{0}', space=sflag, size = 0x40, scoped, tag = 'scratch operand']
  #allocation7 [shape = 's32[1]{0}', space=sflag, size = 0x4, scoped, tag = 'scoped memory for tpu_custom_call.1']
  #allocation8 [shape = 'u8[4096]{0}', space=smem, size = 0x1000, scoped, tag = 'prefetched SMEM operand 0']
  #allocation13 [shape = 's32[]', space=sflag, size = 0x4, offset = 0, fixed_abs, tag = 'sflag constant byte address 0x0 - dummy sync flag']
  #allocation14 [shape = 's32[]', space=sflag, size = 0x4, offset = 0, fixed_abs, tag = 'sflag constant byte address 0x0 - dummy sync flag']
  #allocation15 [shape = 's32[]', space=sflag, size = 0x4, offset = 0, fixed_abs, tag = 'sflag constant byte address 0x0 - dummy sync flag']
  #allocation16 [shape = 's32[]', space=sflag, size = 0x4, offset = 0, fixed_abs, tag = 'sflag constant byte address 0x0 - dummy sync flag']
  #allocation17 [shape = 's32[]', space=sflag, size = 0x4, offset = 0, fixed_abs, tag = 'sflag constant byte address 0x0 - dummy sync flag']
  #allocation18 [shape = 's32[]', space=sflag, size = 0x4, offset = 0, fixed_abs, tag = 'sflag constant byte address 0x0 - dummy sync flag']
  #allocation19 [shape = 's32[]', space=sflag, size = 0x4, offset = 0, fixed_abs, tag = 'sflag constant byte address 0x0 - dummy sync flag']
  #allocation20 [shape = 's32[]', space=sflag, size = 0x4, offset = 0, fixed_abs, tag = 'sflag constant byte address 0x0 - dummy sync flag']
  #allocation21 [shape = 's32[]', space=sflag, size = 0x4, offset = 0, fixed_abs, tag = 'sflag constant byte address 0x0 - dummy sync flag']
  #allocation22 [shape = 's32[]', space=sflag, size = 0x4, offset = 0, fixed_abs, tag = 'sflag constant byte address 0x0 - dummy sync flag']
  #allocation23 [shape = 's32[]', space=sflag, size = 0x4, offset = 0, fixed_abs, tag = 'sflag constant byte address 0x0 - dummy sync flag']
  #allocation24 [shape = 's32[]', space=sflag, size = 0x4, offset = 0, fixed_abs, tag = 'sflag constant byte address 0x0 - dummy sync flag']
  #allocation25 [shape = 's32[]', space=sflag, size = 0x4, offset = 0, fixed_abs, tag = 'sflag constant byte address 0x0 - dummy sync flag']
  #allocation26 [shape = 's32[]', space=sflag, size = 0x4, offset = 0, fixed_abs, tag = 'sflag constant byte address 0x0 - dummy sync flag']
  #allocation27 [shape = 's32[]', space=sflag, size = 0x4, offset = 0, fixed_abs, tag = 'sflag constant byte address 0x0 - dummy sync flag']
  #allocation28 [shape = 's32[]', space=sflag, size = 0x4, offset = 0, fixed_abs, tag = 'sflag constant byte address 0x0 - dummy sync flag']
  %s0 = inlined_call_operand.vmem [shape: s32[6,8], index: 0, kind: input, shape index: {}]
  %s1 = inlined_call_operand.hbm [shape: f32[64,256], index: 1, kind: input, shape index: {}]
  %s2 = inlined_call_operand.hbm [shape: f32[64,256], index: 2, kind: input, shape index: {}]
  %s3 = inlined_call_operand.vmem [shape: f32[8,64], index: 3, kind: input, shape index: {}]
  %s4 = inlined_call_operand.vmem [shape: f32[8,64], index: 4, kind: input, shape index: {}]
  %s5 = inlined_call_operand.vmem [shape: f32[6,8,1], index: 5, kind: input, shape index: {}]
  %s6 = inlined_call_operand.hbm [shape: f32[8,128], index: 6, kind: output, shape index: {}]
  %s7 = sld [smem:[#allocation0]]
  $region65: #{tpu_custom_call.1} parent=0
    _
  %s9 = ssub.s32 1, %s7
  %s10 = scalar_select 0, %s9, %s7
  %s11 = sshll.u32 %s0, 4
  %s12 = int_to_ptr.vmem [resolvable:$true] %s11
  %14 = dma.vmem_to_smem %s12, 128, [#allocation8], [#allocation7]
  %15 = dma.done [#allocation7], 128
  %16 = sfence
  $region1: #{tpu_custom_call.1} parent=0
    #allocation9 [shape = 'u8[65536]{0}', space=vmem, size = 0x10000, scoped, tag = 'input window, operand 2, single buffered']
    #allocation10 [shape = 's32[2]{0}', space=sflag, size = 0x8, scoped, tag = 'scoped memory for tpu_custom_call.1']
    #allocation11 [shape = 's32[2]{0}', space=sflag, size = 0x8, scoped, tag = 'scoped memory for tpu_custom_call.1']
    #allocation12 [shape = 'u8[4096]{0}', space=vmem, size = 0x1000, scoped, tag = 'output window, operand 0, single buffered']
    %17 = vsyncpa [#allocation10], 0
    %18 = vsyncpa [#allocation11], 0
    loop: start=0, step=1, limit=8
    $region2: #{tpu_custom_call.1} parent=1 // loop_pre_header
      _
    $region3: #{tpu_custom_call.1} parent=1 // loop_header
      %s20 = sphi 0, %s24
      %p21 = scmp.ge.s32.totalorder %s20, 8
      %s28 = sphi 0, %s28
      %s30 = sphi 0, %s28
      %s31 = sphi 0, %s30
      %s45 = sphi 0, %s31
      %s49 = sphi 0, %s49
      %s51 = sphi 0, %s49
      %s52 = sphi 0, %s51
      %s66 = sphi 0, %s52
      %s70 = sphi 0, %s70
      %s72 = sphi 0, %s70
      %s73 = sphi 0, %s72
      %s87 = sphi 0, %s73
      %s93 = sphi 0, %s95
      %s96 = sphi 0, %s93
      %s97 = sphi 0, %s96
      %s113 = sphi 0, %s97
      %s117 = sphi 0, %s117
      %s119 = sphi 0, %s117
      %s120 = sphi 0, %s119
      %s134 = sphi 0, %s120
    $region4: #{tpu_custom_call.1} parent=1 // loop_header_branch
      %23 = sbr.rel (%p21) target = $region8
    $region5: #{tpu_custom_call.1} parent=1 // loop_body
      %s25 = ssub.s32 %s20, 1
      %s26 = ssub.s32 %s20, 2
      %s27 = sadd.s32 %s20, 1
      %s29 = sadd.s32 %s28, 1
      %p32 = scmp.eq.s32.totalorder %s20, 5
      %p33 = scmp.ne.s32.totalorder %s28, %s30
      %p34 = scmp.eq.s32.totalorder %s20, 0
      %p35 = por %p33, %p34
      %p36 = scmp.ne.s32.totalorder %s28, %s30
      %p37 = scmp.eq.s32.totalorder %s25, 5
      %p38 = por %p36, %p37
      %p39 = scmp.ne.s32.totalorder %s30, %s31
      %p40 = scmp.eq.s32.totalorder %s25, 0
      %p41 = por %p39, %p40
      %p42 = scmp.ne.s32.totalorder %s30, %s31
      %p43 = scmp.eq.s32.totalorder %s26, 5
      %p44 = por %p42, %p43
      %p46 = scmp.ne.s32.totalorder %s31, %s45
      %p47 = scmp.eq.s32.totalorder %s26, 0
      %p48 = por %p46, %p47
      %s50 = sadd.s32 %s49, 1
      %p53 = scmp.eq.s32.totalorder %s20, 5
      %p54 = scmp.ne.s32.totalorder %s49, %s51
      %p55 = scmp.eq.s32.totalorder %s20, 0
      %p56 = por %p54, %p55
      %p57 = scmp.ne.s32.totalorder %s49, %s51
      %p58 = scmp.eq.s32.totalorder %s25, 5
      %p59 = por %p57, %p58
      %p60 = scmp.ne.s32.totalorder %s51, %s52
      %p61 = scmp.eq.s32.totalorder %s25, 0
      %p62 = por %p60, %p61
      %p63 = scmp.ne.s32.totalorder %s51, %s52
      %p64 = scmp.eq.s32.totalorder %s26, 5
      %p65 = por %p63, %p64
      %p67 = scmp.ne.s32.totalorder %s52, %s66
      %p68 = scmp.eq.s32.totalorder %s26, 0
      %p69 = por %p67, %p68
      %s71 = sadd.s32 %s70, 1
      %p74 = scmp.eq.s32.totalorder %s20, 5
      %p75 = scmp.ne.s32.totalorder %s70, %s72
      %p76 = scmp.eq.s32.totalorder %s20, 0
      %p77 = por %p75, %p76
      %p78 = scmp.ne.s32.totalorder %s70, %s72
      %p79 = scmp.eq.s32.totalorder %s25, 5
      %p80 = por %p78, %p79
      %p81 = scmp.ne.s32.totalorder %s72, %s73
      %p82 = scmp.eq.s32.totalorder %s25, 0
      %p83 = por %p81, %p82
      %p84 = scmp.ne.s32.totalorder %s72, %s73
      %p85 = scmp.eq.s32.totalorder %s26, 5
      %p86 = por %p84, %p85
      %p88 = scmp.ne.s32.totalorder %s73, %s87
      %p89 = scmp.eq.s32.totalorder %s26, 0
      %p90 = por %p88, %p89
      %s91 = ssub.s32 %s20, %s27
      %p92 = scmp.eq.s32.totalorder %s91, 0
      %s94 = sadd.s32 %s93, 1
      %s95 = scalar_select %p92, %s93, %s94
      %p98 = pneg %p92
      %p99 = scmp.eq.s32.totalorder %s20, 5
      %p100 = por %p98, %p99
      %p101 = scmp.ne.s32.totalorder %s93, %s96
      %p102 = scmp.eq.s32.totalorder %s20, 0
      %p103 = por %p101, %p102
      %p104 = scmp.ne.s32.totalorder %s93, %s96
      %p105 = scmp.eq.s32.totalorder %s25, 5
      %p106 = por %p104, %p105
      %p107 = scmp.ne.s32.totalorder %s96, %s97
      %p108 = scmp.eq.s32.totalorder %s25, 0
      %p109 = por %p107, %p108
      %p110 = scmp.ne.s32.totalorder %s96, %s97
      %p111 = scmp.eq.s32.totalorder %s26, 5
      %p112 = por %p110, %p111
      %p114 = scmp.ne.s32.totalorder %s97, %s113
      %p115 = scmp.eq.s32.totalorder %s26, 0
      %p116 = por %p114, %p115
      %s118 = sadd.s32 %s117, 1
      %p121 = scmp.eq.s32.totalorder %s20, 5
      %p122 = scmp.ne.s32.totalorder %s117, %s119
      %p123 = scmp.eq.s32.totalorder %s20, 0
      %p124 = por %p122, %p123
      %p125 = scmp.ne.s32.totalorder %s117, %s119
      %p126 = scmp.eq.s32.totalorder %s25, 5
      %p127 = por %p125, %p126
      %p128 = scmp.ne.s32.totalorder %s119, %s120
      %p129 = scmp.eq.s32.totalorder %s25, 0
      %p130 = por %p128, %p129
      %p131 = scmp.ne.s32.totalorder %s119, %s120
      %p132 = scmp.eq.s32.totalorder %s26, 5
      %p133 = por %p131, %p132
      %p135 = scmp.ne.s32.totalorder %s120, %s134
      %p136 = scmp.eq.s32.totalorder %s26, 0
      %p137 = por %p135, %p136
      %p138 = scmp.le.s32.totalorder 1, %s20
      %p139 = scmp.lt.s32.totalorder %s20, 7
      %p140 = pnand %p138, %p139
      %p141 = pneg %p140
      // Predicated region
      $region9: #{tpu_custom_call.1} parent=5 // pred_check
        _
      $region10: #{tpu_custom_call.1} parent=5 // pred_check_branch
        %143 = sbr.rel (%p140) target = $region12
      $region11: #{tpu_custom_call.1} parent=5 // pred_region
        %s144 = ssub.s32 %s20, 1
        // Predicated region
        $region13: #{tpu_custom_call.1} parent=11 // pred_check
          %p145 = pneg %p41
        $region14: #{tpu_custom_call.1} parent=11 // pred_check_branch
          %147 = sbr.rel (%p145) target = $region16
        $region15: #{tpu_custom_call.1} parent=11 // pred_region
          %s149 = ssub.s32 2048, 2048
          %150 = vsyncadd [#allocation10], %s149
          %s151 = sshll.u32 [#allocation9], 4
          %s152 = int_to_ptr.vmem [resolvable:$true] %s151
          %157 = dma.hbm_to_vmem [thread:$0]  %s2, 2048, %s152, [#allocation10], 256, 256, 16
        $region16: #{tpu_custom_call.1} parent=11 // pred_fallthru
          _
        // Predicated region
        $region17: #{tpu_custom_call.1} parent=11 // pred_check
          %p158 = pneg %p62
        $region18: #{tpu_custom_call.1} parent=11 // pred_check_branch
          %160 = sbr.rel (%p158) target = $region20
        $region19: #{tpu_custom_call.1} parent=11 // pred_region
          _
        $region20: #{tpu_custom_call.1} parent=11 // pred_fallthru
          _
        // Predicated region
        $region21: #{tpu_custom_call.1} parent=11 // pred_check
          %p161 = pneg %p83
        $region22: #{tpu_custom_call.1} parent=11 // pred_check_branch
          %163 = sbr.rel (%p161) target = $region24
        $region23: #{tpu_custom_call.1} parent=11 // pred_region
          _
        $region24: #{tpu_custom_call.1} parent=11 // pred_fallthru
          _
      $region12: #{tpu_custom_call.1} parent=5 // pred_fallthru
        _
      %p164 = scmp.lt.s32.totalorder %s20, 6
      // Predicated region
      $region25: #{tpu_custom_call.1} parent=5 // pred_check
        %p165 = pneg %p164
      $region26: #{tpu_custom_call.1} parent=5 // pred_check_branch
        %167 = sbr.rel (%p165) target = $region28
      $region27: #{tpu_custom_call.1} parent=5 // pred_region
        // Predicated region
        $region29: #{tpu_custom_call.1} parent=27 // pred_check
          %p168 = pneg %p103
        $region30: #{tpu_custom_call.1} parent=27 // pred_check_branch
          %170 = sbr.rel (%p168) target = $region32
        $region31: #{tpu_custom_call.1} parent=27 // pred_region
          %p171 = scmp.lt.s32.totalorder %s20, 5
          %s172 = scalar_select %p171, %s20, 5
          %s173 = smul.addr %s172, 8
          %s174 = scalar_lea.vmem %s5, %s173
        $region32: #{tpu_custom_call.1} parent=27 // pred_fallthru
          _
      $region28: #{tpu_custom_call.1} parent=5 // pred_fallthru
        _
      %p175 = scmp.le.s32.totalorder 1, %s20
      %p176 = scmp.lt.s32.totalorder %s20, 7
      %p177 = pnand %p175, %p176
      %p178 = pneg %p177
      // Predicated region
      $region33: #{tpu_custom_call.1} parent=5 // pred_check
        _
      $region34: #{tpu_custom_call.1} parent=5 // pred_check_branch
        %180 = sbr.rel (%p177) target = $region36
      $region35: #{tpu_custom_call.1} parent=5 // pred_region
        %s181 = ssub.s32 %s20, 1
        // Predicated region
        $region37: #{tpu_custom_call.1} parent=35 // pred_check
          %p182 = pneg %p41
        $region38: #{tpu_custom_call.1} parent=35 // pred_check_branch
          %184 = sbr.rel (%p182) target = $region40
        $region39: #{tpu_custom_call.1} parent=35 // pred_region
          %185 = dma.done [#allocation10], 2048
        $region40: #{tpu_custom_call.1} parent=35 // pred_fallthru
          _
        %p186 = pneg %p41
        %p187 = pneg %p38
        %p188 = pneg %p62
        %p189 = pneg %p59
        %p190 = pneg %p83
        %p191 = pneg %p80
        %p192 = scmp.lt.s32.totalorder %s25, 5
        %s193 = scalar_select %p192, %s25, 5
        %s194 = smul.addr %s193, 8
        %s195 = scalar_lea.vmem %s5, %s194
        %p196 = pneg %p109
        %p197 = pneg %p106
        %p198 = pneg %p130
        %p199 = pneg %p127
        %p200 = scmp.lt.s32.totalorder %s25, 5
        %s201 = scalar_select %p200, %s25, 5
        %s202 = smul.addr %s201, 8
        %s203 = scalar_lea.vmem %s5, %s202
        %p204 = scmp.eq.s32.totalorder %s25, 0
        // Predicated region
        $region41: #{tpu_custom_call.1} parent=35 // pred_check
          %p205 = pneg %p204
        $region42: #{tpu_custom_call.1} parent=35 // pred_check_branch
          %207 = sbr.rel (%p205) target = $region44
        $region43: #{tpu_custom_call.1} parent=35 // pred_region
          %v208 = vld [vmem:[%s3] sm:$0xff]
          %vm209 = vcmask 523264
          %210 = vst.msk [vmem:[#allocation2] sm:$0xff] %vm209, %v208
          %v211 = vld [vmem:[%s4] sm:$0xff]
          %212 = vst.msk [vmem:[#allocation3] sm:$0xff] %vm209, %v211
          %v213 = vlaneseq
          %v214 = vand.u32 %v213, 127
          %v215 = vadd.s32 %v214, 128
          %vm216 = vcmp.ge.s32.totalorder %v214, 128
          %vm217 = vcmp.ge.s32.totalorder %v215, 128
          %vm218 = vcmp.lt.s32.totalorder %v214, 192
          %vm219 = vcmp.lt.s32.totalorder %v215, 192
          %vm220 = vmand %vm216, %vm218
          %vm221 = vmand %vm217, %vm219
          %v222 = vsel %vm220, 1.0, 0.5
          %v223 = vsel %vm221, 1.0, 0.5
          %v226 = vcombine.low %v222, %v223
          %v228 = vunpack.c.l.s4 1966171168
          %v229 = vunpack.c.0.s8 %v228
          %v230 = vlaneseq
          %v231 = vshrl.u32 %v230, 7
          %v232 = vsub.s32 %v229, %v231
          %v233 = vrot.slane %v226, %v232
          %v235 = vunpack.c.l.s4 1966171168
          %v236 = vunpack.c.0.s8 %v235
          %v237 = vlaneseq
          %v238 = vshrl.u32 %v237, 7
          %v239 = vsub.s32 %v236, %v238
          %v240 = vrot.slane %v233, %v239
          %v242 = vlaneseq
          %vm243 = vcmp.ge.s32.totalorder %v242, 0
          %vm244 = vcmp.lt.s32.totalorder %v242, 256
          %vm245 = vmand %vm243, %vm244
          %246 = vst.msk [vmem:[#allocation4] sm:$0x3] %vm245, %v240
          %s247 = sld [smem:[#allocation8]]
          %s248 = sshrl.u32 %s247, 3
          %s249 = sand.u32 %s247, 7
          %s250 = smul.u32 %s248, 16
          %s251 = sadd.s32 %s249, %s250
          %s252 = smul.addr %s251, 16
          %s253 = scalar_lea.hbm %s1, %s252
          %s255 = sshll.u32 [#allocation5], 4
          %s256 = int_to_ptr.vmem [resolvable:$true] %s255
          %258 = dma.hbm_to_vmem [thread:$0]  %s253, 32, %s256, [#allocation6], 128, 128, 1
          %s259 = sld [smem:[#allocation8 + $0x1]]
          %s260 = sshrl.u32 %s259, 3
          %s261 = sand.u32 %s259, 7
          %s262 = smul.u32 %s260, 16
          %s263 = sadd.s32 %s261, %s262
          %s264 = smul.addr %s263, 16
          %s265 = scalar_lea.hbm %s1, %s264
          %s266 = scalar_lea.vmem [#allocation5], 1
          %s267 = scalar_lea.sflag [#allocation6], 1
          %s269 = sshll.u32 %s266, 4
          %s270 = int_to_ptr.vmem [resolvable:$true] %s269
          %272 = dma.hbm_to_vmem [thread:$0]  %s265, 32, %s270, %s267, 128, 128, 1
          %s273 = sld [smem:[#allocation8 + $0x2]]
          %s274 = sshrl.u32 %s273, 3
          %s275 = sand.u32 %s273, 7
          %s276 = smul.u32 %s274, 16
          %s277 = sadd.s32 %s275, %s276
          %s278 = smul.addr %s277, 16
          %s279 = scalar_lea.hbm %s1, %s278
          %s280 = scalar_lea.vmem [#allocation5], 2
          %s281 = scalar_lea.sflag [#allocation6], 2
          %s283 = sshll.u32 %s280, 4
          %s284 = int_to_ptr.vmem [resolvable:$true] %s283
          %286 = dma.hbm_to_vmem [thread:$0]  %s279, 32, %s284, %s281, 128, 128, 1
          %s287 = sld [smem:[#allocation8 + $0x3]]
          %s288 = sshrl.u32 %s287, 3
          %s289 = sand.u32 %s287, 7
          %s290 = smul.u32 %s288, 16
          %s291 = sadd.s32 %s289, %s290
          %s292 = smul.addr %s291, 16
          %s293 = scalar_lea.hbm %s1, %s292
          %s294 = scalar_lea.vmem [#allocation5], 3
          %s295 = scalar_lea.sflag [#allocation6], 3
          %s297 = sshll.u32 %s294, 4
          %s298 = int_to_ptr.vmem [resolvable:$true] %s297
          %300 = dma.hbm_to_vmem [thread:$0]  %s293, 32, %s298, %s295, 128, 128, 1
          %s301 = sld [smem:[#allocation8 + $0x4]]
          %s302 = sshrl.u32 %s301, 3
          %s303 = sand.u32 %s301, 7
          %s304 = smul.u32 %s302, 16
          %s305 = sadd.s32 %s303, %s304
          %s306 = smul.addr %s305, 16
          %s307 = scalar_lea.hbm %s1, %s306
          %s308 = scalar_lea.vmem [#allocation5], 4
          %s309 = scalar_lea.sflag [#allocation6], 4
          %s311 = sshll.u32 %s308, 4
          %s312 = int_to_ptr.vmem [resolvable:$true] %s311
          %314 = dma.hbm_to_vmem [thread:$0]  %s307, 32, %s312, %s309, 128, 128, 1
          %s315 = sld [smem:[#allocation8 + $0x5]]
          %s316 = sshrl.u32 %s315, 3
          %s317 = sand.u32 %s315, 7
          %s318 = smul.u32 %s316, 16
          %s319 = sadd.s32 %s317, %s318
          %s320 = smul.addr %s319, 16
          %s321 = scalar_lea.hbm %s1, %s320
          %s322 = scalar_lea.vmem [#allocation5], 5
          %s323 = scalar_lea.sflag [#allocation6], 5
          %s325 = sshll.u32 %s322, 4
          %s326 = int_to_ptr.vmem [resolvable:$true] %s325
          %328 = dma.hbm_to_vmem [thread:$0]  %s321, 32, %s326, %s323, 128, 128, 1
          %s329 = sld [smem:[#allocation8 + $0x6]]
          %s330 = sshrl.u32 %s329, 3
          %s331 = sand.u32 %s329, 7
          %s332 = smul.u32 %s330, 16
          %s333 = sadd.s32 %s331, %s332
          %s334 = smul.addr %s333, 16
          %s335 = scalar_lea.hbm %s1, %s334
          %s336 = scalar_lea.vmem [#allocation5], 6
          %s337 = scalar_lea.sflag [#allocation6], 6
          %s339 = sshll.u32 %s336, 4
          %s340 = int_to_ptr.vmem [resolvable:$true] %s339
          %342 = dma.hbm_to_vmem [thread:$0]  %s335, 32, %s340, %s337, 128, 128, 1
          %s343 = sld [smem:[#allocation8 + $0x7]]
          %s344 = sshrl.u32 %s343, 3
          %s345 = sand.u32 %s343, 7
          %s346 = smul.u32 %s344, 16
          %s347 = sadd.s32 %s345, %s346
          %s348 = smul.addr %s347, 16
          %s349 = scalar_lea.hbm %s1, %s348
          %s350 = scalar_lea.vmem [#allocation5], 7
          %s351 = scalar_lea.sflag [#allocation6], 7
          %s353 = sshll.u32 %s350, 4
          %s354 = int_to_ptr.vmem [resolvable:$true] %s353
          %356 = dma.hbm_to_vmem [thread:$0]  %s349, 32, %s354, %s351, 128, 128, 1
        $region44: #{tpu_custom_call.1} parent=35 // pred_fallthru
          _
        %p357 = scmp.lt.s32.totalorder %s25, 0
        %s358 = ssub.s32 0, %s25
        %s359 = scalar_select %p357, %s358, %s25
        %s360 = sand.u32 %s359, 1
        %s361 = ssub.s32 0, %s360
        %s362 = scalar_select %p357, %s361, %s360
        %p363 = scmp.ne.s32.totalorder %s362, 0
        %p364 = scmp.lt.s32.totalorder %s362, 0
        %p365 = pnand %p364, %p363
        %p366 = pneg %p365
        %s367 = sadd.s32 %s362, 2
        %s368 = scalar_select %p366, %s367, %s362
        %s369 = smul.u32 %s368, 8
        %s370 = scalar_lea.sflag [#allocation6], %s369
        %s371 = smul.u32 1, 2
        %s372 = sshll.u32 %s371, 4
        %373 = dma.done %s370, %s372
        %s374 = sadd.s32 1, %s369
        %s375 = scalar_lea.sflag [#allocation6], %s374
        %s376 = sshll.u32 %s371, 4
        %377 = dma.done %s375, %s376
        %s378 = sadd.s32 2, %s369
        %s379 = scalar_lea.sflag [#allocation6], %s378
        %s380 = sshll.u32 %s371, 4
        %381 = dma.done %s379, %s380
        %s382 = sadd.s32 3, %s369
        %s383 = scalar_lea.sflag [#allocation6], %s382
        %s384 = sshll.u32 %s371, 4
        %385 = dma.done %s383, %s384
        %s386 = sadd.s32 4, %s369
        %s387 = scalar_lea.sflag [#allocation6], %s386
        %s388 = sshll.u32 %s371, 4
        %389 = dma.done %s387, %s388
        %s390 = sadd.s32 5, %s369
        %s391 = scalar_lea.sflag [#allocation6], %s390
        %s392 = sshll.u32 %s371, 4
        %393 = dma.done %s391, %s392
        %s394 = sadd.s32 6, %s369
        %s395 = scalar_lea.sflag [#allocation6], %s394
        %s396 = sshll.u32 %s371, 4
        %397 = dma.done %s395, %s396
        %s398 = sadd.s32 7, %s369
        %s399 = scalar_lea.sflag [#allocation6], %s398
        %s400 = sshll.u32 %s371, 4
        %401 = dma.done %s399, %s400
        %s402 = sadd.s32 %s25, 1
        %p403 = scmp.lt.s32.totalorder %s402, 6
        // Predicated region
        $region45: #{tpu_custom_call.1} parent=35 // pred_check
          %p404 = pneg %p403
        $region46: #{tpu_custom_call.1} parent=35 // pred_check_branch
          %406 = sbr.rel (%p404) target = $region48
        $region47: #{tpu_custom_call.1} parent=35 // pred_region
          %s407 = ssub.s32 1, %s368
          %s408 = smul.u32 %s402, 128
          %s409 = sld [smem:[#allocation8 + %s408]]
          %s410 = sshrl.u32 %s409, 3
          %s411 = sand.u32 %s409, 7
          %s412 = smul.u32 %s410, 16
          %s413 = sadd.s32 %s411, %s412
          %s414 = smul.addr %s413, 16
          %s415 = scalar_lea.hbm %s1, %s414
          %s416 = smul.u32 %s407, 16
          %s417 = scalar_lea.vmem [#allocation5], %s416
          %s418 = smul.u32 %s407, 8
          %s419 = scalar_lea.sflag [#allocation6], %s418
          %s421 = sshll.u32 %s417, 4
          %s422 = int_to_ptr.vmem [resolvable:$true] %s421
          %424 = dma.hbm_to_vmem [thread:$0]  %s415, 32, %s422, %s419, 128, 128, 1
          %s425 = sadd.s32 %s408, 1
          %s426 = sld [smem:[#allocation8 + %s425]]
          %s427 = sshrl.u32 %s426, 3
          %s428 = sand.u32 %s426, 7
          %s429 = smul.u32 %s427, 16
          %s430 = sadd.s32 %s428, %s429
          %s431 = smul.addr %s430, 16
          %s432 = scalar_lea.hbm %s1, %s431
          %s433 = sadd.s32 1, %s416
          %s434 = scalar_lea.vmem [#allocation5], %s433
          %s435 = sadd.s32 1, %s418
          %s436 = scalar_lea.sflag [#allocation6], %s435
          %s438 = sshll.u32 %s434, 4
          %s439 = int_to_ptr.vmem [resolvable:$true] %s438
          %441 = dma.hbm_to_vmem [thread:$0]  %s432, 32, %s439, %s436, 128, 128, 1
          %s442 = sadd.s32 %s408, 2
          %s443 = sld [smem:[#allocation8 + %s442]]
          %s444 = sshrl.u32 %s443, 3
          %s445 = sand.u32 %s443, 7
          %s446 = smul.u32 %s444, 16
          %s447 = sadd.s32 %s445, %s446
          %s448 = smul.addr %s447, 16
          %s449 = scalar_lea.hbm %s1, %s448
          %s450 = sadd.s32 2, %s416
          %s451 = scalar_lea.vmem [#allocation5], %s450
          %s452 = sadd.s32 2, %s418
          %s453 = scalar_lea.sflag [#allocation6], %s452
          %s455 = sshll.u32 %s451, 4
          %s456 = int_to_ptr.vmem [resolvable:$true] %s455
          %458 = dma.hbm_to_vmem [thread:$0]  %s449, 32, %s456, %s453, 128, 128, 1
          %s459 = sadd.s32 %s408, 3
          %s460 = sld [smem:[#allocation8 + %s459]]
          %s461 = sshrl.u32 %s460, 3
          %s462 = sand.u32 %s460, 7
          %s463 = smul.u32 %s461, 16
          %s464 = sadd.s32 %s462, %s463
          %s465 = smul.addr %s464, 16
          %s466 = scalar_lea.hbm %s1, %s465
          %s467 = sadd.s32 3, %s416
          %s468 = scalar_lea.vmem [#allocation5], %s467
          %s469 = sadd.s32 3, %s418
          %s470 = scalar_lea.sflag [#allocation6], %s469
          %s472 = sshll.u32 %s468, 4
          %s473 = int_to_ptr.vmem [resolvable:$true] %s472
          %475 = dma.hbm_to_vmem [thread:$0]  %s466, 32, %s473, %s470, 128, 128, 1
          %s476 = sadd.s32 %s408, 4
          %s477 = sld [smem:[#allocation8 + %s476]]
          %s478 = sshrl.u32 %s477, 3
          %s479 = sand.u32 %s477, 7
          %s480 = smul.u32 %s478, 16
          %s481 = sadd.s32 %s479, %s480
          %s482 = smul.addr %s481, 16
          %s483 = scalar_lea.hbm %s1, %s482
          %s484 = sadd.s32 4, %s416
          %s485 = scalar_lea.vmem [#allocation5], %s484
          %s486 = sadd.s32 4, %s418
          %s487 = scalar_lea.sflag [#allocation6], %s486
          %s489 = sshll.u32 %s485, 4
          %s490 = int_to_ptr.vmem [resolvable:$true] %s489
          %492 = dma.hbm_to_vmem [thread:$0]  %s483, 32, %s490, %s487, 128, 128, 1
          %s493 = sadd.s32 %s408, 5
          %s494 = sld [smem:[#allocation8 + %s493]]
          %s495 = sshrl.u32 %s494, 3
          %s496 = sand.u32 %s494, 7
          %s497 = smul.u32 %s495, 16
          %s498 = sadd.s32 %s496, %s497
          %s499 = smul.addr %s498, 16
          %s500 = scalar_lea.hbm %s1, %s499
          %s501 = sadd.s32 5, %s416
          %s502 = scalar_lea.vmem [#allocation5], %s501
          %s503 = sadd.s32 5, %s418
          %s504 = scalar_lea.sflag [#allocation6], %s503
          %s506 = sshll.u32 %s502, 4
          %s507 = int_to_ptr.vmem [resolvable:$true] %s506
          %509 = dma.hbm_to_vmem [thread:$0]  %s500, 32, %s507, %s504, 128, 128, 1
          %s510 = sadd.s32 %s408, 6
          %s511 = sld [smem:[#allocation8 + %s510]]
          %s512 = sshrl.u32 %s511, 3
          %s513 = sand.u32 %s511, 7
          %s514 = smul.u32 %s512, 16
          %s515 = sadd.s32 %s513, %s514
          %s516 = smul.addr %s515, 16
          %s517 = scalar_lea.hbm %s1, %s516
          %s518 = sadd.s32 6, %s416
          %s519 = scalar_lea.vmem [#allocation5], %s518
          %s520 = sadd.s32 6, %s418
          %s521 = scalar_lea.sflag [#allocation6], %s520
          %s523 = sshll.u32 %s519, 4
          %s524 = int_to_ptr.vmem [resolvable:$true] %s523
          %526 = dma.hbm_to_vmem [thread:$0]  %s517, 32, %s524, %s521, 128, 128, 1
          %s527 = sadd.s32 %s408, 7
          %s528 = sld [smem:[#allocation8 + %s527]]
          %s529 = sshrl.u32 %s528, 3
          %s530 = sand.u32 %s528, 7
          %s531 = smul.u32 %s529, 16
          %s532 = sadd.s32 %s530, %s531
          %s533 = smul.addr %s532, 16
          %s534 = scalar_lea.hbm %s1, %s533
          %s535 = sadd.s32 7, %s416
          %s536 = scalar_lea.vmem [#allocation5], %s535
          %s537 = sadd.s32 7, %s418
          %s538 = scalar_lea.sflag [#allocation6], %s537
          %s540 = sshll.u32 %s536, 4
          %s541 = int_to_ptr.vmem [resolvable:$true] %s540
          %543 = dma.hbm_to_vmem [thread:$0]  %s534, 32, %s541, %s538, 128, 128, 1
        $region48: #{tpu_custom_call.1} parent=35 // pred_fallthru
          _
        %v544 = vld [vmem:[#allocation2] sm:$0xff]
        %v545 = vld [vmem:[#allocation3] sm:$0xff]
        %s546 = smul.u32 %s368, 2
        %s547 = smul.addr %s546, 8
        %s548 = scalar_lea.vmem [#allocation5], %s547
        %v549 = vld [vmem:[%s548] sm:$0xff]
        %v550 = vld [vmem:[%s548 + $0x8] sm:$0xff]
        %v551 = vld [vmem:[#allocation9] sm:$0xff]
        %v552 = vld [vmem:[#allocation9 + $0x8] sm:$0xff]
        %v553 = vld [vmem:[#allocation9 + $0x10] sm:$0xff]
        %v554 = vld [vmem:[#allocation9 + $0x18] sm:$0xff]
        %v555 = vld [vmem:[#allocation9 + $0x20] sm:$0xff]
        %v556 = vld [vmem:[#allocation9 + $0x28] sm:$0xff]
        %v557 = vld [vmem:[#allocation9 + $0x30] sm:$0xff]
        %v558 = vld [vmem:[#allocation9 + $0x38] sm:$0xff]
        %v559 = vld [vmem:[#allocation9 + $0x40] sm:$0xff]
        %v560 = vld [vmem:[#allocation9 + $0x48] sm:$0xff]
        %v561 = vld [vmem:[#allocation9 + $0x50] sm:$0xff]
        %v562 = vld [vmem:[#allocation9 + $0x58] sm:$0xff]
        %v563 = vld [vmem:[#allocation9 + $0x60] sm:$0xff]
        %v564 = vld [vmem:[#allocation9 + $0x68] sm:$0xff]
        %v565 = vld [vmem:[#allocation9 + $0x70] sm:$0xff]
        %v566 = vld [vmem:[#allocation9 + $0x78] sm:$0xff]
        %vm567 = vcmask 523264
        %v569 = vsel %vm567, %v544, 0
        %571 = vmatprep.subr.mxu0 %v552
        %572 = vmatpush1.msra.mxu0 %v551
        %573 = vmatprep.subr.mxu0 %v554
        %574 = vmatpush1.msra.mxu0 %v553
        %575 = vmatprep.subr.mxu0 %v556
        %576 = vmatpush1.msra.mxu0 %v555
        %577 = vmatprep.subr.mxu0 %v558
        %578 = vmatpush1.msra.mxu0 %v557
        %579 = vmatprep.subr.mxu0 %v560
        %580 = vmatpush1.msra.mxu0 %v559
        %581 = vmatprep.subr.mxu0 %v562
        %582 = vmatpush1.msra.mxu0 %v561
        %583 = vmatprep.subr.mxu0 %v564
        %584 = vmatpush1.msra.mxu0 %v563
        %585 = vmatprep.subr.mxu0 %v566
        %586 = vmatpush1.msra.mxu0 %v565
        %587 = vmatprep.subr.mxu0 0.0
        %588 = vmatpush1.msra.mxu0 0.0
        %589 = vmatprep.subr.mxu0 0.0
        %590 = vmatpush1.msra.mxu0 0.0
        %591 = vmatprep.subr.mxu0 0.0
        %592 = vmatpush1.msra.mxu0 0.0
        %593 = vmatprep.subr.mxu0 0.0
        %594 = vmatpush1.msra.mxu0 0.0
        %595 = vmatprep.subr.mxu0 0.0
        %596 = vmatpush1.msra.mxu0 0.0
        %597 = vmatprep.subr.mxu0 0.0
        %598 = vmatpush1.msra.mxu0 0.0
        %599 = vmatprep.subr.mxu0 0.0
        %600 = vmatpush1.msra.mxu0 0.0
        %601 = vmatprep.subr.mxu0 0.0
        %602 = vmatpush1.msra.mxu0 0.0
        %603 = vmatprep.subr.mxu0 0.0
        %604 = vmatpush1.msra.mxu0 0.0
        %605 = vmatprep.subr.mxu0 0.0
        %606 = vmatpush1.msra.mxu0 0.0
        %607 = vmatprep.subr.mxu0 0.0
        %608 = vmatpush1.msra.mxu0 0.0
        %609 = vmatprep.subr.mxu0 0.0
        %610 = vmatpush1.msra.mxu0 0.0
        %611 = vmatprep.subr.mxu0 0.0
        %612 = vmatpush1.msra.mxu0 0.0
        %613 = vmatprep.subr.mxu0 0.0
        %614 = vmatpush1.msra.mxu0 0.0
        %615 = vmatprep.subr.mxu0 0.0
        %616 = vmatpush1.msra.mxu0 0.0
        %617 = vmatprep.subr.mxu0 0.0
        %618 = vmatpush1.msra.mxu0 0.0
        %619 = vmatprep.subr.mxu0 0.0
        %620 = vmatpush1.msra.mxu0 0.0
        %621 = vmatprep.subr.mxu0 0.0
        %622 = vmatpush1.msra.mxu0 0.0
        %623 = vmatprep.subr.mxu0 0.0
        %624 = vmatpush1.msra.mxu0 0.0
        %625 = vmatprep.subr.mxu0 0.0
        %626 = vmatpush1.msra.mxu0 0.0
        %627 = vmatprep.subr.mxu0 0.0
        %628 = vmatpush1.msra.mxu0 0.0
        %629 = vmatprep.subr.mxu0 0.0
        %630 = vmatpush1.msra.mxu0 0.0
        %631 = vmatprep.subr.mxu0 0.0
        %632 = vmatpush1.msra.mxu0 0.0
        %633 = vmatprep.subr.mxu0 0.0
        %634 = vmatpush1.msra.mxu0 0.0
        %635 = vmatprep.mubr.f32.mxu0 0.0
        %636 = vmatmul.mubr.f32.gmra.mrb[0].mxu0 %v569
        %v637 = vpop.f32.mrb[0].mxu0
        %v638 = vadd.f32 0.0, %v637
        %v639 = vpop.f32.mrb[0].mxu0
        %v640 = vadd.f32 0.0, %v639
        %641 = vdwg.mxu0
        %v642 = vadd.f32 %v549, %v638
        %v643 = vadd.f32 %v550, %v640
        %v644 = vld [vmem:[#allocation4] sm:$0x3]
        %v646 = vlaneseq
        %v647 = vshrl.u32 %v646, 7
        %v648 = vsub.s32 0, %v647
        %v649 = vrot.slane %v644, %v648
        %v650 = vlaneseq
        %v651 = vshrl.u32 %v650, 7
        %v652 = vsub.s32 1, %v651
        %v653 = vrot.slane %v644, %v652
        %v656 = vmul.f32 %v642, %v649
        %v657 = vmul.f32 %v643, %v653
        %v658 = vtanh.pop %v656
        %v659 = vtanh.pop %v657
        %v660 = vmul.f32 %v658, %v649
        %v661 = vmul.f32 %v659, %v653
        %v662 = vsub.f32 1.0, %v644
        %v664 = vlaneseq
        %v665 = vshrl.u32 %v664, 7
        %v666 = vsub.s32 0, %v665
        %v667 = vrot.slane %v662, %v666
        %v668 = vlaneseq
        %v669 = vshrl.u32 %v668, 7
        %v670 = vsub.s32 1, %v669
        %v671 = vrot.slane %v662, %v670
        %v674 = vadd.f32 %v660, %v667
        %v675 = vadd.f32 %v661, %v671
        %677 = vrot.lane.b32.xlu0 %v545, 64
        %v678 = vpop.permute.xlu0 %677
        %v680 = vmul.f32 %v674, %v678
        %v681 = vmul.f32 %v674, %v675
        %683 = vrot.lane.b32.xlu0 %v681, 64
        %v684 = vpop.permute.xlu0 %683
        %v686 = vadd.f32 %v680, %v684
        %v687 = vtanh.pop %v686
        %v688 = vmul.f32 %v675, %v687
        %v689 = vld [vmem:[%s203] sm:$0xff]
        %691 = vset.pattern.permute.xlu0 0
        %692 = vperm.xlu0 %691, %v689
        %v693 = vpop.permute.xlu0 %692
        %v695 = vmul.f32 %v693, %v544
        %v696 = vsub.f32 1.0, %v689
        %698 = vset.pattern.permute.xlu0 0
        %699 = vperm.xlu0 %698, %v696
        %v700 = vpop.permute.xlu0 %699
        %v702 = vmul.f32 %v700, %v688
        %704 = vrot.lane.b32.xlu0 %v702, 64
        %v705 = vpop.permute.xlu0 %704
        %v707 = vadd.f32 %v695, %v705
        %708 = vst.msk [vmem:[#allocation2] sm:$0xff] %vm567, %v707
        %v709 = vmul.f32 %v693, %v545
        %v710 = vmul.f32 %v700, %v686
        %712 = vrot.lane.b32.xlu0 %v710, 64
        %v713 = vpop.permute.xlu0 %712
        %v715 = vadd.f32 %v709, %v713
        %716 = vst.msk [vmem:[#allocation3] sm:$0xff] %vm567, %v715
        %p717 = scmp.eq.s32.totalorder %s25, 5
        // Predicated region
        $region49: #{tpu_custom_call.1} parent=35 // pred_check
          %p718 = pneg %p717
        $region50: #{tpu_custom_call.1} parent=35 // pred_check_branch
          %720 = sbr.rel (%p718) target = $region52
        $region51: #{tpu_custom_call.1} parent=35 // pred_region
          %v721 = vld [vmem:[#allocation2] sm:$0xff]
          %722 = vst.msk [vmem:[#allocation12] sm:$0xff] %vm567, %v721
          %v723 = vld [vmem:[#allocation3] sm:$0xff]
          %725 = vrot.lane.b32.xlu0 %v723, 64
          %v726 = vpop.permute.xlu0 %725
          %vm728 = vcmask 1048064
          %729 = vst.msk [vmem:[#allocation12] sm:$0xff] %vm728, %v726
        $region52: #{tpu_custom_call.1} parent=35 // pred_fallthru
          _
        // Predicated region
        $region53: #{tpu_custom_call.1} parent=35 // pred_check
          %p730 = pneg %p127
        $region54: #{tpu_custom_call.1} parent=35 // pred_check_branch
          %732 = sbr.rel (%p730) target = $region56
        $region55: #{tpu_custom_call.1} parent=35 // pred_region
          %s734 = ssub.s32 128, 128
          %735 = vsyncadd [#allocation11], %s734
          %s737 = sshll.u32 [#allocation12], 4
          %s738 = int_to_ptr.vmem [resolvable:$true] %s737
          %740 = dma.vmem_to_hbm [thread:$0]  %s738, 128, %s6, [#allocation11]
        $region56: #{tpu_custom_call.1} parent=35 // pred_fallthru
          _
        // Predicated region
        $region57: #{tpu_custom_call.1} parent=35 // pred_check
          %p741 = pneg %p127
        $region58: #{tpu_custom_call.1} parent=35 // pred_check_branch
          %743 = sbr.rel (%p741) target = $region60
        $region59: #{tpu_custom_call.1} parent=35 // pred_region
          %744 = dma.done [#allocation11], 128
        $region60: #{tpu_custom_call.1} parent=35 // pred_fallthru
          _
      $region36: #{tpu_custom_call.1} parent=5 // pred_fallthru
        _
      %p745 = scmp.le.s32.totalorder 2, %s20
      // Predicated region
      $region61: #{tpu_custom_call.1} parent=5 // pred_check
        %p746 = pneg %p745
      $region62: #{tpu_custom_call.1} parent=5 // pred_check_branch
        %748 = sbr.rel (%p746) target = $region64
      $region63: #{tpu_custom_call.1} parent=5 // pred_region
        %s749 = ssub.s32 %s20, 2
      $region64: #{tpu_custom_call.1} parent=5 // pred_fallthru
        _
    $region6: #{tpu_custom_call.1} parent=1 // loop_footer
      %s24 = sadd.s32 1, %s20
    $region7: #{tpu_custom_call.1} parent=1 // loop_footer_branch
      %19 = sbr.rel target = $region3
    $region8: #{tpu_custom_call.1} parent=1 // loop_exit
      _
    %750 = vsyncpa [#allocation10], 1
    %s751 = scalar_lea.sflag [#allocation10], 1
    %752 = vsyncpa %s751, 1
    %753 = vsyncpa [#allocation11], 1
    %s754 = scalar_lea.sflag [#allocation11], 1
    %755 = vsyncpa %s754, 1
  %756 = vsyncmov [#allocation6]
  %s757 = vpop.sfrf %756
  %p758 = scmp.eq.s32.totalorder %s757, 0
  %p759 = pneg %p758
  %761 = shalt.err (%p759)
  %s762 = scalar_lea.sflag [#allocation6], 1
  %763 = vsyncmov %s762
  %s764 = vpop.sfrf %763
  %p765 = scmp.eq.s32.totalorder %s764, 0
  %p766 = pneg %p765
  %768 = shalt.err (%p766)
  %s769 = scalar_lea.sflag [#allocation6], 2
  %770 = vsyncmov %s769
  %s771 = vpop.sfrf %770
  %p772 = scmp.eq.s32.totalorder %s771, 0
  %p773 = pneg %p772
  %775 = shalt.err (%p773)
  %s776 = scalar_lea.sflag [#allocation6], 3
  %777 = vsyncmov %s776
  %s778 = vpop.sfrf %777
  %p779 = scmp.eq.s32.totalorder %s778, 0
  %p780 = pneg %p779
  %782 = shalt.err (%p780)
  %s783 = scalar_lea.sflag [#allocation6], 4
  %784 = vsyncmov %s783
  %s785 = vpop.sfrf %784
  %p786 = scmp.eq.s32.totalorder %s785, 0
  %p787 = pneg %p786
  %789 = shalt.err (%p787)
  %s790 = scalar_lea.sflag [#allocation6], 5
  %791 = vsyncmov %s790
  %s792 = vpop.sfrf %791
  %p793 = scmp.eq.s32.totalorder %s792, 0
  %p794 = pneg %p793
  %796 = shalt.err (%p794)
  %s797 = scalar_lea.sflag [#allocation6], 6
  %798 = vsyncmov %s797
  %s799 = vpop.sfrf %798
  %p800 = scmp.eq.s32.totalorder %s799, 0
  %p801 = pneg %p800
  %803 = shalt.err (%p801)
  %s804 = scalar_lea.sflag [#allocation6], 7
  %805 = vsyncmov %s804
  %s806 = vpop.sfrf %805
  %p807 = scmp.eq.s32.totalorder %s806, 0
  %p808 = pneg %p807
  %810 = shalt.err (%p808)
  %s811 = scalar_lea.sflag [#allocation6], 8
  %812 = vsyncmov %s811
  %s813 = vpop.sfrf %812
  %p814 = scmp.eq.s32.totalorder %s813, 0
  %p815 = pneg %p814
  %817 = shalt.err (%p815)
  %s818 = scalar_lea.sflag [#allocation6], 9
  %819 = vsyncmov %s818
  %s820 = vpop.sfrf %819
  %p821 = scmp.eq.s32.totalorder %s820, 0
  %p822 = pneg %p821
  %824 = shalt.err (%p822)
  %s825 = scalar_lea.sflag [#allocation6], 10
  %826 = vsyncmov %s825
  %s827 = vpop.sfrf %826
  %p828 = scmp.eq.s32.totalorder %s827, 0
  %p829 = pneg %p828
  %831 = shalt.err (%p829)
  %s832 = scalar_lea.sflag [#allocation6], 11
  %833 = vsyncmov %s832
  %s834 = vpop.sfrf %833
  %p835 = scmp.eq.s32.totalorder %s834, 0
  %p836 = pneg %p835
  %838 = shalt.err (%p836)
  %s839 = scalar_lea.sflag [#allocation6], 12
  %840 = vsyncmov %s839
  %s841 = vpop.sfrf %840
  %p842 = scmp.eq.s32.totalorder %s841, 0
  %p843 = pneg %p842
  %845 = shalt.err (%p843)
  %s846 = scalar_lea.sflag [#allocation6], 13
  %847 = vsyncmov %s846
  %s848 = vpop.sfrf %847
  %p849 = scmp.eq.s32.totalorder %s848, 0
  %p850 = pneg %p849
  %852 = shalt.err (%p850)
  %s853 = scalar_lea.sflag [#allocation6], 14
  %854 = vsyncmov %s853
  %s855 = vpop.sfrf %854
  %p856 = scmp.eq.s32.totalorder %s855, 0
  %p857 = pneg %p856
  %859 = shalt.err (%p857)
  %s860 = scalar_lea.sflag [#allocation6], 15
  %861 = vsyncmov %s860
  %s862 = vpop.sfrf %861
  %p863 = scmp.eq.s32.totalorder %s862, 0
  %p864 = pneg %p863
  %866 = shalt.err (%p864)

</llo_original>
